<compile_context>
chip_gen: v5e
topology: v5e:2x2
jax: 0.10.0
libtpu: 0.0.40
codegen_flags: <defaults>
</compile_context>

<pallas_src>
import functools
import math

import jax
import jax.numpy as jnp
from jax.experimental import pallas as pl
from jax.experimental.pallas import tpu as pltpu

LN_EPS = 1e-5


# ----------------------------------------------------------------------------
# In-kernel helpers
# ----------------------------------------------------------------------------
def _layernorm(x, gamma, beta, eps=LN_EPS):
    mu = jnp.mean(x, axis=-1, keepdims=True)
    var = jnp.mean((x - mu) ** 2, axis=-1, keepdims=True)
    return (x - mu) * jax.lax.rsqrt(var + eps) * gamma + beta


# ----------------------------------------------------------------------------
# Fused transformer kernel (one grid step = one (batch group, layer) pair)
# ----------------------------------------------------------------------------
def fused_transformer_kernel(
    x_in_ref, pos_ref, in_w_ref, in_b_ref,
    wqkv_ref, bqkv_ref, wo_ref, bo_ref,
    ln1g_ref, ln1b_ref,
    w1_ref, b1_ref, w2_ref, b2_ref,
    ln2g_ref, ln2b_ref,
    out_w_ref, out_b_ref,
    o_ref,
    x_s,
    *, n_head, b_tile,
):
    l = pl.program_id(1)
    n_layers = pl.num_programs(1)
    M, C = x_s.shape                      # M = b_tile * T
    T = M // b_tile
    D = C // n_head
    bf16 = jnp.bfloat16

    # --- layer 0 only: input projection + positional encoding -> resident VMEM scratch
    @pl.when(l == 0)
    def _():
        xin = x_in_ref[...].reshape(M, -1)                               # (M, Cin)
        h = jnp.dot(xin.astype(bf16), in_w_ref[...],
                    preferred_element_type=jnp.float32) + in_b_ref[...]   # (M, C)
        h = h.reshape(b_tile, T, C) + pos_ref[...]                        # + (1, T, C)
        x_s[...] = h.reshape(M, C)

    x = x_s[...]                                                          # (M, C) f32
    x_bf = x.astype(bf16)                                                 # hoisted MXU cast

    # --- fused QKV projection (q columns pre-scaled by 1/sqrt(D) at prep time) --------
    qkv = jnp.dot(x_bf, wqkv_ref[0],
                  preferred_element_type=jnp.float32) + bqkv_ref[0]       # (M, 3C) f32

    # --- attention: per-head by-value lane slices, heads contracted straight into W_o --
    # (no VMEM scratch round-trips; only leading-dim reshapes, so no relayout)
    wo = wo_ref[0]                                                        # (C, C) bf16
    acc = None
    for hi in range(n_head):
        qh = qkv[:, hi * D:(hi + 1) * D].reshape(b_tile, T, D).astype(bf16)
        kh = qkv[:, C + hi * D:C + (hi + 1) * D].reshape(b_tile, T, D).astype(bf16)
        vh = qkv[:, 2 * C + hi * D:2 * C + (hi + 1) * D].reshape(b_tile, T, D).astype(bf16)
        s = jnp.einsum('btd,bsd->bts', qh, kh,
                       preferred_element_type=jnp.float32)                # (Bt, T, T) f32
        s = s - jnp.max(s, axis=-1, keepdims=True)
        # TODO(synk): at large T on v6e/v7x, compute exp on bf16 inputs if the EUP becomes
        # the binding slot (keep f32 on v5e, no bf16 EUP there).
        p = jnp.exp(s)
        p = p * pl.reciprocal(jnp.sum(p, axis=-1, keepdims=True), approx=True)
        oh = jnp.einsum('bts,bsd->btd', p.astype(bf16), vh,
                        preferred_element_type=jnp.float32)               # (Bt, T, D) f32
        contrib = jnp.dot(oh.reshape(M, D).astype(bf16),
                          wo[hi * D:(hi + 1) * D, :],
                          preferred_element_type=jnp.float32)             # (M, C) f32
        acc = contrib if acc is None else acc + contrib
    attn = acc + bo_ref[0]

    # --- residual + LayerNorm 1 (post-norm, PyTorch default) ---------------------------
    h1 = _layernorm(x + attn, ln1g_ref[0], ln1b_ref[0])

    # --- feed-forward: Linear -> ReLU -> Linear ----------------------------------------
    f = jnp.dot(h1.astype(bf16), w1_ref[0],
                preferred_element_type=jnp.float32) + b1_ref[0]
    f = jnp.maximum(f, 0.0)
    f = jnp.dot(f.astype(bf16), w2_ref[0],
                preferred_element_type=jnp.float32) + b2_ref[0]

    # --- residual + LayerNorm 2 ---------------------------------------------------------
    h2 = _layernorm(h1 + f, ln2g_ref[0], ln2b_ref[0])
    x_s[...] = h2

    # --- last layer only: lane-dense (padded to 128) output projection ------------------
    @pl.when(l == n_layers - 1)
    def _():
        y = jnp.dot(h2.astype(bf16), out_w_ref[...],
                    preferred_element_type=jnp.float32) + out_b_ref[...]   # (M, n_pad)
        o_ref[...] = y.reshape(b_tile, T, -1)


# ----------------------------------------------------------------------------
# Wrapper helpers
# ----------------------------------------------------------------------------
def _choose_b_tile(B, T, target_m=512):
    """Largest divisor of B such that B_tile*T <= max(target_m, T)."""
    bt = 1
    for cand in range(1, B + 1):
        if B % cand == 0 and cand * T <= max(target_m, T):
            bt = cand
    return bt


def _pick_vmem_limit(C, F, Cin, n_pad, M):
    """Explicit VMEM budget: double-buffered per-layer bf16 weights + f32 activation temps."""
    w_layer = 2 * (3 * C * C + C * C + C * F + F * C)          # bf16 bytes, one layer
    acts = 4 * M * (3 * C + 8 * C + n_pad + Cin)               # generous f32 temporaries
    fixed = 2 * (Cin * C + C * n_pad) + 4 * (n_pad + C)
    est = 2 * w_layer + acts + fixed
    try:
        cap = int(getattr(pltpu.get_tpu_info(), "vmem_capacity_bytes", 64 << 20))
    except Exception:
        cap = 64 << 20                                         # v7x-safe fallback
    return int(min(cap * 9 // 10, max(32 << 20, (est * 3) // 2)))


# ----------------------------------------------------------------------------
# Wrapper: parameter packing + single pallas_call
# ----------------------------------------------------------------------------
def classical_transformer_forward(params, inputs, n_head):
    B, T, Cin = inputs.shape
    C = params["in_w"].shape[1]
    out_dim = params["out_w"].shape[1]
    n_layers = len(params["layers"])
    F = params["layers"][0][10].shape[1]          # w1: (C, F)
    D = C // n_head
    n_pad = ((out_dim + 127) // 128) * 128        # lane-dense output width
    bf16 = jnp.bfloat16

    B_tile = _choose_b_tile(B, T)
    M = B_tile * T

    x_in = inputs.astype(jnp.float32)
    pos = params["pos"][:, :T, :]                 # (1, T, C)

    # ---- pack / stack per-layer weights; fold 1/sqrt(D) into q; bf16 MXU operands -----
    scale = 1.0 / math.sqrt(D)
    wqkv_l, bqkv_l = [], []
    wo_l, bo_l, ln1g_l, ln1b_l = [], [], [], []
    w1_l, b1_l, w2_l, b2_l, ln2g_l, ln2b_l = [], [], [], [], [], []
    for (wq, bq, wk, bk, wv, bv, wo, bo,
         ln1g, ln1b, w1, b1, w2, b2, ln2g, ln2b) in params["layers"]:
        wqkv_l.append(jnp.concatenate([wq * scale, wk, wv], axis=1))   # (C, 3C)
        bqkv_l.append(jnp.concatenate([bq * scale, bk, bv], axis=1))   # (1, 3C)
        wo_l.append(wo); bo_l.append(bo)
        ln1g_l.append(ln1g); ln1b_l.append(ln1b)
        w1_l.append(w1); b1_l.append(b1)
        w2_l.append(w2); b2_l.append(b2)
        ln2g_l.append(ln2g); ln2b_l.append(ln2b)

    wqkv = jnp.stack(wqkv_l).astype(bf16)          # (L, C, 3C)
    bqkv = jnp.stack(bqkv_l)                       # (L, 1, 3C) f32
    wo_s = jnp.stack(wo_l).astype(bf16)            # (L, C, C)
    bo_s = jnp.stack(bo_l)
    ln1g_s = jnp.stack(ln1g_l); ln1b_s = jnp.stack(ln1b_l)
    w1_s = jnp.stack(w1_l).astype(bf16)            # (L, C, F)
    b1_s = jnp.stack(b1_l)
    w2_s = jnp.stack(w2_l).astype(bf16)            # (L, F, C)
    b2_s = jnp.stack(b2_l)
    ln2g_s = jnp.stack(ln2g_l); ln2b_s = jnp.stack(ln2b_l)

    in_w = params["in_w"].astype(bf16)             # (Cin, C)
    in_b = params["in_b"]                          # (1, C) f32
    out_w_pad = (jnp.zeros((C, n_pad), jnp.float32)
                 .at[:, :out_dim].set(params["out_w"]).astype(bf16))
    out_b_pad = jnp.zeros((1, n_pad), jnp.float32).at[:, :out_dim].set(params["out_b"])

    # ---- BlockSpecs --------------------------------------------------------------------
    def b_map(b, l): return (b, 0, 0)
    def const3(b, l): return (0, 0, 0)
    def const2(b, l): return (0, 0)
    def layer3(b, l): return (l, 0, 0)

    # TODO(synk): at realistic C (>=512) on v7x (64 MiB VMEM), tile w1/w2 along the FFN
    # dim with an extra "arbitrary" grid axis (accumulating the second FFN matmul), or
    # single-buffer them (pipeline_mode=pl.Buffered(1)) to halve the weight footprint.
    in_specs = [
        pl.BlockSpec((B_tile, T, Cin), b_map),     # x_in (B_tile batch rows per step)
        pl.BlockSpec((1, T, C), const3),           # pos
        pl.BlockSpec((Cin, C), const2),            # in_w
        pl.BlockSpec((1, C), const2),              # in_b
        pl.BlockSpec((1, C, 3 * C), layer3),       # wqkv (stacked over layers)
        pl.BlockSpec((1, 1, 3 * C), layer3),       # bqkv
        pl.BlockSpec((1, C, C), layer3),           # wo
        pl.BlockSpec((1, 1, C), layer3),           # bo
        pl.BlockSpec((1, 1, C), layer3),           # ln1 gamma
        pl.BlockSpec((1, 1, C), layer3),           # ln1 beta
        pl.BlockSpec((1, C, F), layer3),           # w1
        pl.BlockSpec((1, 1, F), layer3),           # b1
        pl.BlockSpec((1, F, C), layer3),           # w2
        pl.BlockSpec((1, 1, C), layer3),           # b2
        pl.BlockSpec((1, 1, C), layer3),           # ln2 gamma
        pl.BlockSpec((1, 1, C), layer3),           # ln2 beta
        pl.BlockSpec((C, n_pad), const2),          # out_w (lane-padded)
        pl.BlockSpec((1, n_pad), const2),          # out_b
    ]
    out_spec = pl.BlockSpec((B_tile, T, n_pad), b_map)

    grid_spec = pltpu.PrefetchScalarGridSpec(
        num_scalar_prefetch=0,
        grid=(B // B_tile, n_layers),
        in_specs=in_specs,
        out_specs=out_spec,
        scratch_shapes=[
            pltpu.VMEM((M, C), jnp.float32),       # resident activations (B_tile*T, C)
        ],
    )

    kern = functools.partial(fused_transformer_kernel, n_head=n_head, b_tile=B_tile)
    preds_pad = pl.pallas_call(
        kern,
        grid_spec=grid_spec,
        out_shape=jax.ShapeDtypeStruct((B, T, n_pad), jnp.float32),
        compiler_params=pltpu.CompilerParams(
            dimension_semantics=("parallel", "arbitrary"),
            vmem_limit_bytes=_pick_vmem_limit(C, F, Cin, n_pad, M),
        ),
    )(x_in, pos, in_w, in_b,
      wqkv, bqkv, wo_s, bo_s, ln1g_s, ln1b_s,
      w1_s, b1_s, w2_s, b2_s, ln2g_s, ln2b_s,
      out_w_pad, out_b_pad)

    return preds_pad[:, :, :out_dim], None


# ----------------------------------------------------------------------------
# Parameter construction (deterministic, mirrors module __init__ shapes)
# ----------------------------------------------------------------------------
def _linear_params(key, fan_in, fan_out):
    kw, kb = jax.random.split(key)
    bound = 1.0 / math.sqrt(fan_in)
    w = jax.random.uniform(kw, (fan_in, fan_out), jnp.float32, -bound, bound)
    b = jax.random.uniform(kb, (1, fan_out), jnp.float32, -bound, bound)
    return w, b


def init_params(key, input_dim, output_dim, n_embd, n_head, n_layers):
    keys = jax.random.split(key, 2 + n_layers)
    params = {}
    params["in_w"], params["in_b"] = _linear_params(keys[0], input_dim, n_embd)
    params["out_w"], params["out_b"] = _linear_params(keys[1], n_embd, output_dim)
    params["pos"] = jnp.zeros((1, 512, n_embd), jnp.float32)   # nn.Parameter(zeros(1,512,C))

    layers = []
    ffn = n_embd * 4
    for li in range(n_layers):
        lk = jax.random.split(keys[2 + li], 6)
        wq, bq = _linear_params(lk[0], n_embd, n_embd)
        wk, bk = _linear_params(lk[1], n_embd, n_embd)
        wv, bv = _linear_params(lk[2], n_embd, n_embd)
        wo, bo = _linear_params(lk[3], n_embd, n_embd)
        w1, b1 = _linear_params(lk[4], n_embd, ffn)
        w2, b2 = _linear_params(lk[5], ffn, n_embd)
        ln1g = jnp.ones((1, n_embd), jnp.float32)
        ln1b = jnp.zeros((1, n_embd), jnp.float32)
        ln2g = jnp.ones((1, n_embd), jnp.float32)
        ln2b = jnp.zeros((1, n_embd), jnp.float32)
        layers.append((wq, bq, wk, bk, wv, bv, wo, bo,
                       ln1g, ln1b, w1, b1, w2, b2, ln2g, ln2b))
    params["layers"] = layers
    return params


# ----------------------------------------------------------------------------
# Pure-JAX reference (f32) for a sanity check
# ----------------------------------------------------------------------------
def _ref_ln(x, g, b):
    mu = jnp.mean(x, axis=-1, keepdims=True)
    var = jnp.mean((x - mu) ** 2, axis=-1, keepdims=True)
    return (x - mu) * jax.lax.rsqrt(var + LN_EPS) * g + b


def reference_forward(params, inputs, n_head):
    B, T, _ = inputs.shape
    C = params["in_w"].shape[1]
    D = C // n_head
    x = inputs.astype(jnp.float32) @ params["in_w"] + params["in_b"]
    x = x + params["pos"][:, :T, :]
    for (wq, bq, wk, bk, wv, bv, wo, bo,
         ln1g, ln1b, w1, b1, w2, b2, ln2g, ln2b) in params["layers"]:
        q = (x @ wq + bq).reshape(B, T, n_head, D).transpose(0, 2, 1, 3)
        k = (x @ wk + bk).reshape(B, T, n_head, D).transpose(0, 2, 1, 3)
        v = (x @ wv + bv).reshape(B, T, n_head, D).transpose(0, 2, 1, 3)
        s = jnp.einsum('bhtd,bhsd->bhts', q, k) / math.sqrt(D)
        p = jax.nn.softmax(s, axis=-1)
        o = jnp.einsum('bhts,bhsd->bhtd', p, v)
        o = o.transpose(0, 2, 1, 3).reshape(B, T, C)
        attn = o @ wo + bo
        x = _ref_ln(x + attn, ln1g, ln1b)
        f = jnp.maximum(x @ w1 + b1, 0.0) @ w2 + b2
        x = _ref_ln(x + f, ln2g, ln2b)
    return x @ params["out_w"] + params["out_b"]


# ----------------------------------------------------------------------------
if __name__ == "__main__":
    B, T = 2, 8
    input_dim, output_dim = 8, 4
    n_embd, n_head, n_layers = 32, 4, 2

    key = jax.random.PRNGKey(0)
    pkey, xkey = jax.random.split(key)
    params = init_params(pkey, input_dim, output_dim, n_embd, n_head, n_layers)
    inputs = jax.random.normal(xkey, (B, T, input_dim), dtype=jnp.float32)

    preds, hidden = classical_transformer_forward(params, inputs, n_head)
    preds = jax.block_until_ready(preds)
    assert preds.shape == (B, T, output_dim)
    assert hidden is None

    # sanity check against pure-JAX f32 reference (bf16 MXU operands -> loose tolerance)
    with jax.default_matmul_precision("float32"):
        ref = jax.block_until_ready(reference_forward(params, inputs, n_head))
    max_err = float(jnp.max(jnp.abs(preds - ref)))
    assert max_err < 5e-2, f"mismatch vs reference: {max_err}"

    print("KERNEL_OK")
</pallas_src>

<mosaic_0001>
module attributes {stable_mosaic.version = 11 : i64} {
  func.func @fused_transformer_kernel(%arg0: i32, %arg1: i32, %arg2: memref<2x8x8xf32, #tpu.memory_space<vmem>>, %arg3: memref<1x8x32xf32, #tpu.memory_space<vmem>>, %arg4: memref<8x32xbf16, #tpu.memory_space<vmem>>, %arg5: memref<1x32xf32, #tpu.memory_space<vmem>>, %arg6: memref<1x32x96xbf16, #tpu.memory_space<vmem>>, %arg7: memref<1x1x96xf32, #tpu.memory_space<vmem>>, %arg8: memref<1x32x32xbf16, #tpu.memory_space<vmem>>, %arg9: memref<1x1x32xf32, #tpu.memory_space<vmem>>, %arg10: memref<1x1x32xf32, #tpu.memory_space<vmem>>, %arg11: memref<1x1x32xf32, #tpu.memory_space<vmem>>, %arg12: memref<1x32x128xbf16, #tpu.memory_space<vmem>>, %arg13: memref<1x1x128xf32, #tpu.memory_space<vmem>>, %arg14: memref<1x128x32xbf16, #tpu.memory_space<vmem>>, %arg15: memref<1x1x32xf32, #tpu.memory_space<vmem>>, %arg16: memref<1x1x32xf32, #tpu.memory_space<vmem>>, %arg17: memref<1x1x32xf32, #tpu.memory_space<vmem>>, %arg18: memref<32x128xbf16, #tpu.memory_space<vmem>>, %arg19: memref<1x128xf32, #tpu.memory_space<vmem>>, %arg20: memref<2x8x128xf32, #tpu.memory_space<vmem>>, %arg21: memref<16x32xf32, #tpu.memory_space<vmem>>) attributes {dimension_semantics = [#tpu.dimension_semantics<parallel>, #tpu.dimension_semantics<arbitrary>], iteration_bounds = array<i64: 1, 2>, scalar_prefetch = 0 : i64, scratch_operands = 1 : i64, tpu.core_type = #tpu.core_type<tc>, window_params = [{transform_indices = @transform_0, window_bounds = array<i64: 2, 8, 8>}, {pipeline_mode = #tpu.pipeline_mode<synchronous>, transform_indices = @transform_1, window_bounds = array<i64: 1, 8, 32>}, {pipeline_mode = #tpu.pipeline_mode<synchronous>, transform_indices = @transform_2, window_bounds = array<i64: 8, 32>}, {pipeline_mode = #tpu.pipeline_mode<synchronous>, transform_indices = @transform_3, window_bounds = array<i64: 1, 32>}, {transform_indices = @transform_4, window_bounds = array<i64: 1, 32, 96>}, {transform_indices = @transform_5, window_bounds = array<i64: 1, 1, 96>}, {transform_indices = @transform_6, window_bounds = array<i64: 1, 32, 32>}, {transform_indices = @transform_7, window_bounds = array<i64: 1, 1, 32>}, {transform_indices = @transform_8, window_bounds = array<i64: 1, 1, 32>}, {transform_indices = @transform_9, window_bounds = array<i64: 1, 1, 32>}, {transform_indices = @transform_10, window_bounds = array<i64: 1, 32, 128>}, {transform_indices = @transform_11, window_bounds = array<i64: 1, 1, 128>}, {transform_indices = @transform_12, window_bounds = array<i64: 1, 128, 32>}, {transform_indices = @transform_13, window_bounds = array<i64: 1, 1, 32>}, {transform_indices = @transform_14, window_bounds = array<i64: 1, 1, 32>}, {transform_indices = @transform_15, window_bounds = array<i64: 1, 1, 32>}, {pipeline_mode = #tpu.pipeline_mode<synchronous>, transform_indices = @transform_16, window_bounds = array<i64: 32, 128>}, {pipeline_mode = #tpu.pipeline_mode<synchronous>, transform_indices = @transform_17, window_bounds = array<i64: 1, 128>}, {transform_indices = @transform_18, window_bounds = array<i64: 2, 8, 128>}]} {
    %c0_i32 = arith.constant 0 : i32
    %0 = arith.cmpi eq, %arg1, %c0_i32 : i32
    %1 = arith.extui %0 : i1 to i32
    %c0_i32_0 = arith.constant 0 : i32
    %2 = arith.cmpi ne, %1, %c0_i32_0 : i32
    scf.if %2 {
      %c0_74 = arith.constant 0 : index
      %c0_75 = arith.constant 0 : index
      %c0_76 = arith.constant 0 : index
      %201 = vector.load %arg2[%c0_74, %c0_75, %c0_76] : memref<2x8x8xf32, #tpu.memory_space<vmem>>, vector<2x8x8xf32>
      %202 = vector.shape_cast %201 : vector<2x8x8xf32> to vector<16x8xf32>
      %203 = arith.truncf %202 : vector<16x8xf32> to vector<16x8xbf16>
      %c0_77 = arith.constant 0 : index
      %c0_78 = arith.constant 0 : index
      %204 = vector.load %arg4[%c0_77, %c0_78] : memref<8x32xbf16, #tpu.memory_space<vmem>>, vector<8x32xbf16>
      %cst_79 = arith.constant dense<0.000000e+00> : vector<16x32xf32>
      %205 = tpu.matmul %203, %204, %cst_79 {dimension_numbers = #tpu.dot_dimension_numbers<[1], [0], [0], [1], [0, 0, 1, 1], [], []>} : vector<16x8xbf16>, vector<8x32xbf16>, vector<16x32xf32> -> vector<16x32xf32>
      %c0_80 = arith.constant 0 : index
      %c0_81 = arith.constant 0 : index
      %206 = vector.load %arg5[%c0_80, %c0_81] : memref<1x32xf32, #tpu.memory_space<vmem>>, vector<1x32xf32>
      %207 = vector.broadcast %206 : vector<1x32xf32> to vector<16x32xf32>
      %208 = arith.addf %205, %207 : vector<16x32xf32>
      %209 = vector.shape_cast %208 : vector<16x32xf32> to vector<2x8x32xf32>
      %c0_82 = arith.constant 0 : index
      %c0_83 = arith.constant 0 : index
      %c0_84 = arith.constant 0 : index
      %210 = vector.load %arg3[%c0_82, %c0_83, %c0_84] : memref<1x8x32xf32, #tpu.memory_space<vmem>>, vector<1x8x32xf32>
      %211 = vector.broadcast %210 : vector<1x8x32xf32> to vector<2x8x32xf32>
      %212 = arith.addf %209, %211 : vector<2x8x32xf32>
      %213 = vector.shape_cast %212 : vector<2x8x32xf32> to vector<16x32xf32>
      %c0_85 = arith.constant 0 : index
      %c0_86 = arith.constant 0 : index
      %214 = vector.load %arg21[%c0_85, %c0_86] : memref<16x32xf32, #tpu.memory_space<vmem>>, vector<16x32xf32>
      tpu.vector_store %arg21[%c0_85, %c0_86], %213 {strides = array<i32>} : memref<16x32xf32, #tpu.memory_space<vmem>>, vector<16x32xf32>,
    } else {
    }
    %c0 = arith.constant 0 : index
    %c0_1 = arith.constant 0 : index
    %3 = vector.load %arg21[%c0, %c0_1] : memref<16x32xf32, #tpu.memory_space<vmem>>, vector<16x32xf32>
    %4 = arith.truncf %3 : vector<16x32xf32> to vector<16x32xbf16>
    %c0_2 = arith.constant 0 : index
    %c0_3 = arith.constant 0 : index
    %c0_4 = arith.constant 0 : index
    %5 = vector.load %arg6[%c0_2, %c0_3, %c0_4] : memref<1x32x96xbf16, #tpu.memory_space<vmem>>, vector<1x32x96xbf16>
    %6 = vector.shape_cast %5 : vector<1x32x96xbf16> to vector<32x96xbf16>
    %cst = arith.constant dense<0.000000e+00> : vector<16x96xf32>
    %7 = tpu.matmul %4, %6, %cst {dimension_numbers = #tpu.dot_dimension_numbers<[1], [0], [0], [1], [0, 0, 1, 1], [], []>} : vector<16x32xbf16>, vector<32x96xbf16>, vector<16x96xf32> -> vector<16x96xf32>
    %c0_5 = arith.constant 0 : index
    %c0_6 = arith.constant 0 : index
    %c0_7 = arith.constant 0 : index
    %8 = vector.load %arg7[%c0_5, %c0_6, %c0_7] : memref<1x1x96xf32, #tpu.memory_space<vmem>>, vector<1x1x96xf32>
    %9 = vector.shape_cast %8 : vector<1x1x96xf32> to vector<1x96xf32>
    %10 = vector.broadcast %9 : vector<1x96xf32> to vector<16x96xf32>
    %11 = arith.addf %7, %10 : vector<16x96xf32>
    %c0_8 = arith.constant 0 : index
    %c0_9 = arith.constant 0 : index
    %c0_10 = arith.constant 0 : index
    %12 = vector.load %arg8[%c0_8, %c0_9, %c0_10] : memref<1x32x32xbf16, #tpu.memory_space<vmem>>, vector<1x32x32xbf16>
    %13 = vector.shape_cast %12 : vector<1x32x32xbf16> to vector<32x32xbf16>
    %14 = vector.extract_strided_slice %11 {offsets = [0, 0], sizes = [16, 8], strides = [1, 1]} : vector<16x96xf32> to vector<16x8xf32>
    %15 = vector.shape_cast %14 : vector<16x8xf32> to vector<2x8x8xf32>
    %16 = arith.truncf %15 : vector<2x8x8xf32> to vector<2x8x8xbf16>
    %17 = vector.extract_strided_slice %11 {offsets = [0, 32], sizes = [16, 8], strides = [1, 1]} : vector<16x96xf32> to vector<16x8xf32>
    %18 = vector.shape_cast %17 : vector<16x8xf32> to vector<2x8x8xf32>
    %19 = arith.truncf %18 : vector<2x8x8xf32> to vector<2x8x8xbf16>
    %20 = vector.extract_strided_slice %11 {offsets = [0, 64], sizes = [16, 8], strides = [1, 1]} : vector<16x96xf32> to vector<16x8xf32>
    %21 = vector.shape_cast %20 : vector<16x8xf32> to vector<2x8x8xf32>
    %22 = arith.truncf %21 : vector<2x8x8xf32> to vector<2x8x8xbf16>
    "tpu.trace_start"() <{level = 10 : i32, message = "btd,bsd->bts"}> : () -> ()
    %cst_11 = arith.constant dense<0.000000e+00> : vector<2x8x8xf32>
    %23 = tpu.matmul %16, %19, %cst_11 {dimension_numbers = #tpu.dot_dimension_numbers<[2], [2], [1], [1], [0, 0, 0, 1, 1, 1], [0], [0]>} : vector<2x8x8xbf16>, vector<2x8x8xbf16>, vector<2x8x8xf32> -> vector<2x8x8xf32>
    "tpu.trace_stop"() : () -> ()
    %cst_12 = arith.constant dense<0xFF800000> : vector<2x8xf32>
    %24 = vector.multi_reduction <maximumf>, %23, %cst_12 [2] : vector<2x8x8xf32> to vector<2x8xf32>
    %25 = vector.shape_cast %24 : vector<2x8xf32> to vector<2x8x1xf32>
    %26 = vector.broadcast %25 : vector<2x8x1xf32> to vector<2x8x8xf32>
    %27 = arith.subf %23, %26 : vector<2x8x8xf32>
    %28 = math.exp %27 : vector<2x8x8xf32>
    %cst_13 = arith.constant dense<0.000000e+00> : vector<2x8xf32>
    %29 = vector.multi_reduction <add>, %28, %cst_13 [2] : vector<2x8x8xf32> to vector<2x8xf32>
    %30 = vector.shape_cast %29 : vector<2x8xf32> to vector<2x8x1xf32>
    %31 = tpu.reciprocal %30 {approx = true} : vector<2x8x1xf32> -> vector<2x8x1xf32>
    %32 = vector.broadcast %31 : vector<2x8x1xf32> to vector<2x8x8xf32>
    %33 = arith.mulf %28, %32 : vector<2x8x8xf32>
    %34 = arith.truncf %33 : vector<2x8x8xf32> to vector<2x8x8xbf16>
    "tpu.trace_start"() <{level = 10 : i32, message = "bts,bsd->btd"}> : () -> ()
    %cst_14 = arith.constant dense<0.000000e+00> : vector<2x8x8xf32>
    %35 = tpu.matmul %34, %22, %cst_14 {dimension_numbers = #tpu.dot_dimension_numbers<[2], [1], [1], [2], [0, 0, 0, 1, 1, 2], [0], [0]>} : vector<2x8x8xbf16>, vector<2x8x8xbf16>, vector<2x8x8xf32> -> vector<2x8x8xf32>
    "tpu.trace_stop"() : () -> ()
    %36 = vector.shape_cast %35 : vector<2x8x8xf32> to vector<16x8xf32>
    %37 = arith.truncf %36 : vector<16x8xf32> to vector<16x8xbf16>
    %38 = vector.extract_strided_slice %13 {offsets = [0, 0], sizes = [8, 32], strides = [1, 1]} : vector<32x32xbf16> to vector<8x32xbf16>
    %cst_15 = arith.constant dense<0.000000e+00> : vector<16x32xf32>
    %39 = tpu.matmul %37, %38, %cst_15 {dimension_numbers = #tpu.dot_dimension_numbers<[1], [0], [0], [1], [0, 0, 1, 1], [], []>} : vector<16x8xbf16>, vector<8x32xbf16>, vector<16x32xf32> -> vector<16x32xf32>
    %40 = vector.extract_strided_slice %11 {offsets = [0, 8], sizes = [16, 8], strides = [1, 1]} : vector<16x96xf32> to vector<16x8xf32>
    %41 = vector.shape_cast %40 : vector<16x8xf32> to vector<2x8x8xf32>
    %42 = arith.truncf %41 : vector<2x8x8xf32> to vector<2x8x8xbf16>
    %43 = vector.extract_strided_slice %11 {offsets = [0, 40], sizes = [16, 8], strides = [1, 1]} : vector<16x96xf32> to vector<16x8xf32>
    %44 = vector.shape_cast %43 : vector<16x8xf32> to vector<2x8x8xf32>
    %45 = arith.truncf %44 : vector<2x8x8xf32> to vector<2x8x8xbf16>
    %46 = vector.extract_strided_slice %11 {offsets = [0, 72], sizes = [16, 8], strides = [1, 1]} : vector<16x96xf32> to vector<16x8xf32>
    %47 = vector.shape_cast %46 : vector<16x8xf32> to vector<2x8x8xf32>
    %48 = arith.truncf %47 : vector<2x8x8xf32> to vector<2x8x8xbf16>
    "tpu.trace_start"() <{level = 10 : i32, message = "btd,bsd->bts"}> : () -> ()
    %cst_16 = arith.constant dense<0.000000e+00> : vector<2x8x8xf32>
    %49 = tpu.matmul %42, %45, %cst_16 {dimension_numbers = #tpu.dot_dimension_numbers<[2], [2], [1], [1], [0, 0, 0, 1, 1, 1], [0], [0]>} : vector<2x8x8xbf16>, vector<2x8x8xbf16>, vector<2x8x8xf32> -> vector<2x8x8xf32>
    "tpu.trace_stop"() : () -> ()
    %cst_17 = arith.constant dense<0xFF800000> : vector<2x8xf32>
    %50 = vector.multi_reduction <maximumf>, %49, %cst_17 [2] : vector<2x8x8xf32> to vector<2x8xf32>
    %51 = vector.shape_cast %50 : vector<2x8xf32> to vector<2x8x1xf32>
    %52 = vector.broadcast %51 : vector<2x8x1xf32> to vector<2x8x8xf32>
    %53 = arith.subf %49, %52 : vector<2x8x8xf32>
    %54 = math.exp %53 : vector<2x8x8xf32>
    %cst_18 = arith.constant dense<0.000000e+00> : vector<2x8xf32>
    %55 = vector.multi_reduction <add>, %54, %cst_18 [2] : vector<2x8x8xf32> to vector<2x8xf32>
    %56 = vector.shape_cast %55 : vector<2x8xf32> to vector<2x8x1xf32>
    %57 = tpu.reciprocal %56 {approx = true} : vector<2x8x1xf32> -> vector<2x8x1xf32>
    %58 = vector.broadcast %57 : vector<2x8x1xf32> to vector<2x8x8xf32>
    %59 = arith.mulf %54, %58 : vector<2x8x8xf32>
    %60 = arith.truncf %59 : vector<2x8x8xf32> to vector<2x8x8xbf16>
    "tpu.trace_start"() <{level = 10 : i32, message = "bts,bsd->btd"}> : () -> ()
    %cst_19 = arith.constant dense<0.000000e+00> : vector<2x8x8xf32>
    %61 = tpu.matmul %60, %48, %cst_19 {dimension_numbers = #tpu.dot_dimension_numbers<[2], [1], [1], [2], [0, 0, 0, 1, 1, 2], [0], [0]>} : vector<2x8x8xbf16>, vector<2x8x8xbf16>, vector<2x8x8xf32> -> vector<2x8x8xf32>
    "tpu.trace_stop"() : () -> ()
    %62 = vector.shape_cast %61 : vector<2x8x8xf32> to vector<16x8xf32>
    %63 = arith.truncf %62 : vector<16x8xf32> to vector<16x8xbf16>
    %64 = vector.extract_strided_slice %13 {offsets = [8, 0], sizes = [8, 32], strides = [1, 1]} : vector<32x32xbf16> to vector<8x32xbf16>
    %cst_20 = arith.constant dense<0.000000e+00> : vector<16x32xf32>
    %65 = tpu.matmul %63, %64, %cst_20 {dimension_numbers = #tpu.dot_dimension_numbers<[1], [0], [0], [1], [0, 0, 1, 1], [], []>} : vector<16x8xbf16>, vector<8x32xbf16>, vector<16x32xf32> -> vector<16x32xf32>
    %66 = arith.addf %39, %65 : vector<16x32xf32>
    %67 = vector.extract_strided_slice %11 {offsets = [0, 16], sizes = [16, 8], strides = [1, 1]} : vector<16x96xf32> to vector<16x8xf32>
    %68 = vector.shape_cast %67 : vector<16x8xf32> to vector<2x8x8xf32>
    %69 = arith.truncf %68 : vector<2x8x8xf32> to vector<2x8x8xbf16>
    %70 = vector.extract_strided_slice %11 {offsets = [0, 48], sizes = [16, 8], strides = [1, 1]} : vector<16x96xf32> to vector<16x8xf32>
    %71 = vector.shape_cast %70 : vector<16x8xf32> to vector<2x8x8xf32>
    %72 = arith.truncf %71 : vector<2x8x8xf32> to vector<2x8x8xbf16>
    %73 = vector.extract_strided_slice %11 {offsets = [0, 80], sizes = [16, 8], strides = [1, 1]} : vector<16x96xf32> to vector<16x8xf32>
    %74 = vector.shape_cast %73 : vector<16x8xf32> to vector<2x8x8xf32>
    %75 = arith.truncf %74 : vector<2x8x8xf32> to vector<2x8x8xbf16>
    "tpu.trace_start"() <{level = 10 : i32, message = "btd,bsd->bts"}> : () -> ()
    %cst_21 = arith.constant dense<0.000000e+00> : vector<2x8x8xf32>
    %76 = tpu.matmul %69, %72, %cst_21 {dimension_numbers = #tpu.dot_dimension_numbers<[2], [2], [1], [1], [0, 0, 0, 1, 1, 1], [0], [0]>} : vector<2x8x8xbf16>, vector<2x8x8xbf16>, vector<2x8x8xf32> -> vector<2x8x8xf32>
    "tpu.trace_stop"() : () -> ()
    %cst_22 = arith.constant dense<0xFF800000> : vector<2x8xf32>
    %77 = vector.multi_reduction <maximumf>, %76, %cst_22 [2] : vector<2x8x8xf32> to vector<2x8xf32>
    %78 = vector.shape_cast %77 : vector<2x8xf32> to vector<2x8x1xf32>
    %79 = vector.broadcast %78 : vector<2x8x1xf32> to vector<2x8x8xf32>
    %80 = arith.subf %76, %79 : vector<2x8x8xf32>
    %81 = math.exp %80 : vector<2x8x8xf32>
    %cst_23 = arith.constant dense<0.000000e+00> : vector<2x8xf32>
    %82 = vector.multi_reduction <add>, %81, %cst_23 [2] : vector<2x8x8xf32> to vector<2x8xf32>
    %83 = vector.shape_cast %82 : vector<2x8xf32> to vector<2x8x1xf32>
    %84 = tpu.reciprocal %83 {approx = true} : vector<2x8x1xf32> -> vector<2x8x1xf32>
    %85 = vector.broadcast %84 : vector<2x8x1xf32> to vector<2x8x8xf32>
    %86 = arith.mulf %81, %85 : vector<2x8x8xf32>
    %87 = arith.truncf %86 : vector<2x8x8xf32> to vector<2x8x8xbf16>
    "tpu.trace_start"() <{level = 10 : i32, message = "bts,bsd->btd"}> : () -> ()
    %cst_24 = arith.constant dense<0.000000e+00> : vector<2x8x8xf32>
    %88 = tpu.matmul %87, %75, %cst_24 {dimension_numbers = #tpu.dot_dimension_numbers<[2], [1], [1], [2], [0, 0, 0, 1, 1, 2], [0], [0]>} : vector<2x8x8xbf16>, vector<2x8x8xbf16>, vector<2x8x8xf32> -> vector<2x8x8xf32>
    "tpu.trace_stop"() : () -> ()
    %89 = vector.shape_cast %88 : vector<2x8x8xf32> to vector<16x8xf32>
    %90 = arith.truncf %89 : vector<16x8xf32> to vector<16x8xbf16>
    %91 = vector.extract_strided_slice %13 {offsets = [16, 0], sizes = [8, 32], strides = [1, 1]} : vector<32x32xbf16> to vector<8x32xbf16>
    %cst_25 = arith.constant dense<0.000000e+00> : vector<16x32xf32>
    %92 = tpu.matmul %90, %91, %cst_25 {dimension_numbers = #tpu.dot_dimension_numbers<[1], [0], [0], [1], [0, 0, 1, 1], [], []>} : vector<16x8xbf16>, vector<8x32xbf16>, vector<16x32xf32> -> vector<16x32xf32>
    %93 = arith.addf %66, %92 : vector<16x32xf32>
    %94 = vector.extract_strided_slice %11 {offsets = [0, 24], sizes = [16, 8], strides = [1, 1]} : vector<16x96xf32> to vector<16x8xf32>
    %95 = vector.shape_cast %94 : vector<16x8xf32> to vector<2x8x8xf32>
    %96 = arith.truncf %95 : vector<2x8x8xf32> to vector<2x8x8xbf16>
    %97 = vector.extract_strided_slice %11 {offsets = [0, 56], sizes = [16, 8], strides = [1, 1]} : vector<16x96xf32> to vector<16x8xf32>
    %98 = vector.shape_cast %97 : vector<16x8xf32> to vector<2x8x8xf32>
    %99 = arith.truncf %98 : vector<2x8x8xf32> to vector<2x8x8xbf16>
    %100 = vector.extract_strided_slice %11 {offsets = [0, 88], sizes = [16, 8], strides = [1, 1]} : vector<16x96xf32> to vector<16x8xf32>
    %101 = vector.shape_cast %100 : vector<16x8xf32> to vector<2x8x8xf32>
    %102 = arith.truncf %101 : vector<2x8x8xf32> to vector<2x8x8xbf16>
    "tpu.trace_start"() <{level = 10 : i32, message = "btd,bsd->bts"}> : () -> ()
    %cst_26 = arith.constant dense<0.000000e+00> : vector<2x8x8xf32>
    %103 = tpu.matmul %96, %99, %cst_26 {dimension_numbers = #tpu.dot_dimension_numbers<[2], [2], [1], [1], [0, 0, 0, 1, 1, 1], [0], [0]>} : vector<2x8x8xbf16>, vector<2x8x8xbf16>, vector<2x8x8xf32> -> vector<2x8x8xf32>
    "tpu.trace_stop"() : () -> ()
    %cst_27 = arith.constant dense<0xFF800000> : vector<2x8xf32>
    %104 = vector.multi_reduction <maximumf>, %103, %cst_27 [2] : vector<2x8x8xf32> to vector<2x8xf32>
    %105 = vector.shape_cast %104 : vector<2x8xf32> to vector<2x8x1xf32>
    %106 = vector.broadcast %105 : vector<2x8x1xf32> to vector<2x8x8xf32>
    %107 = arith.subf %103, %106 : vector<2x8x8xf32>
    %108 = math.exp %107 : vector<2x8x8xf32>
    %cst_28 = arith.constant dense<0.000000e+00> : vector<2x8xf32>
    %109 = vector.multi_reduction <add>, %108, %cst_28 [2] : vector<2x8x8xf32> to vector<2x8xf32>
    %110 = vector.shape_cast %109 : vector<2x8xf32> to vector<2x8x1xf32>
    %111 = tpu.reciprocal %110 {approx = true} : vector<2x8x1xf32> -> vector<2x8x1xf32>
    %112 = vector.broadcast %111 : vector<2x8x1xf32> to vector<2x8x8xf32>
    %113 = arith.mulf %108, %112 : vector<2x8x8xf32>
    %114 = arith.truncf %113 : vector<2x8x8xf32> to vector<2x8x8xbf16>
    "tpu.trace_start"() <{level = 10 : i32, message = "bts,bsd->btd"}> : () -> ()
    %cst_29 = arith.constant dense<0.000000e+00> : vector<2x8x8xf32>
    %115 = tpu.matmul %114, %102, %cst_29 {dimension_numbers = #tpu.dot_dimension_numbers<[2], [1], [1], [2], [0, 0, 0, 1, 1, 2], [0], [0]>} : vector<2x8x8xbf16>, vector<2x8x8xbf16>, vector<2x8x8xf32> -> vector<2x8x8xf32>
    "tpu.trace_stop"() : () -> ()
    %116 = vector.shape_cast %115 : vector<2x8x8xf32> to vector<16x8xf32>
    %117 = arith.truncf %116 : vector<16x8xf32> to vector<16x8xbf16>
    %118 = vector.extract_strided_slice %13 {offsets = [24, 0], sizes = [8, 32], strides = [1, 1]} : vector<32x32xbf16> to vector<8x32xbf16>
    %cst_30 = arith.constant dense<0.000000e+00> : vector<16x32xf32>
    %119 = tpu.matmul %117, %118, %cst_30 {dimension_numbers = #tpu.dot_dimension_numbers<[1], [0], [0], [1], [0, 0, 1, 1], [], []>} : vector<16x8xbf16>, vector<8x32xbf16>, vector<16x32xf32> -> vector<16x32xf32>
    %120 = arith.addf %93, %119 : vector<16x32xf32>
    %c0_31 = arith.constant 0 : index
    %c0_32 = arith.constant 0 : index
    %c0_33 = arith.constant 0 : index
    %121 = vector.load %arg9[%c0_31, %c0_32, %c0_33] : memref<1x1x32xf32, #tpu.memory_space<vmem>>, vector<1x1x32xf32>
    %122 = vector.shape_cast %121 : vector<1x1x32xf32> to vector<1x32xf32>
    %123 = vector.broadcast %122 : vector<1x32xf32> to vector<16x32xf32>
    %124 = arith.addf %120, %123 : vector<16x32xf32>
    %125 = arith.addf %3, %124 : vector<16x32xf32>
    %c0_34 = arith.constant 0 : index
    %c0_35 = arith.constant 0 : index
    %c0_36 = arith.constant 0 : index
    %126 = vector.load %arg10[%c0_34, %c0_35, %c0_36] : memref<1x1x32xf32, #tpu.memory_space<vmem>>, vector<1x1x32xf32>
    %127 = vector.shape_cast %126 : vector<1x1x32xf32> to vector<1x32xf32>
    %c0_37 = arith.constant 0 : index
    %c0_38 = arith.constant 0 : index
    %c0_39 = arith.constant 0 : index
    %128 = vector.load %arg11[%c0_37, %c0_38, %c0_39] : memref<1x1x32xf32, #tpu.memory_space<vmem>>, vector<1x1x32xf32>
    %129 = vector.shape_cast %128 : vector<1x1x32xf32> to vector<1x32xf32>
    %cst_40 = arith.constant dense<0.000000e+00> : vector<16xf32>
    %130 = vector.multi_reduction <add>, %125, %cst_40 [1] : vector<16x32xf32> to vector<16xf32>
    %131 = vector.shape_cast %130 : vector<16xf32> to vector<16x1xf32>
    %cst_41 = arith.constant 3.200000e+01 : f32
    %132 = vector.broadcast %cst_41 : f32 to vector<16x1xf32>
    %133 = arith.divf %131, %132 : vector<16x1xf32>
    %134 = vector.broadcast %133 : vector<16x1xf32> to vector<16x32xf32>
    %135 = arith.subf %125, %134 : vector<16x32xf32>
    %136 = arith.mulf %135, %135 : vector<16x32xf32>
    %cst_42 = arith.constant dense<0.000000e+00> : vector<16xf32>
    %137 = vector.multi_reduction <add>, %136, %cst_42 [1] : vector<16x32xf32> to vector<16xf32>
    %138 = vector.shape_cast %137 : vector<16xf32> to vector<16x1xf32>
    %cst_43 = arith.constant 3.200000e+01 : f32
    %139 = vector.broadcast %cst_43 : f32 to vector<16x1xf32>
    %140 = arith.divf %138, %139 : vector<16x1xf32>
    %141 = vector.broadcast %133 : vector<16x1xf32> to vector<16x32xf32>
    %142 = arith.subf %125, %141 : vector<16x32xf32>
    %cst_44 = arith.constant 9.99999974E-6 : f32
    %143 = vector.broadcast %cst_44 : f32 to vector<16x1xf32>
    %144 = arith.addf %140, %143 : vector<16x1xf32>
    %145 = math.rsqrt %144 : vector<16x1xf32>
    %146 = vector.broadcast %145 : vector<16x1xf32> to vector<16x32xf32>
    %147 = arith.mulf %142, %146 : vector<16x32xf32>
    %148 = vector.broadcast %127 : vector<1x32xf32> to vector<16x32xf32>
    %149 = arith.mulf %147, %148 : vector<16x32xf32>
    %150 = vector.broadcast %129 : vector<1x32xf32> to vector<16x32xf32>
    %151 = arith.addf %149, %150 : vector<16x32xf32>
    %152 = arith.truncf %151 : vector<16x32xf32> to vector<16x32xbf16>
    %c0_45 = arith.constant 0 : index
    %c0_46 = arith.constant 0 : index
    %c0_47 = arith.constant 0 : index
    %153 = vector.load %arg12[%c0_45, %c0_46, %c0_47] : memref<1x32x128xbf16, #tpu.memory_space<vmem>>, vector<1x32x128xbf16>
    %154 = vector.shape_cast %153 : vector<1x32x128xbf16> to vector<32x128xbf16>
    %cst_48 = arith.constant dense<0.000000e+00> : vector<16x128xf32>
    %155 = tpu.matmul %152, %154, %cst_48 {dimension_numbers = #tpu.dot_dimension_numbers<[1], [0], [0], [1], [0, 0, 1, 1], [], []>} : vector<16x32xbf16>, vector<32x128xbf16>, vector<16x128xf32> -> vector<16x128xf32>
    %c0_49 = arith.constant 0 : index
    %c0_50 = arith.constant 0 : index
    %c0_51 = arith.constant 0 : index
    %156 = vector.load %arg13[%c0_49, %c0_50, %c0_51] : memref<1x1x128xf32, #tpu.memory_space<vmem>>, vector<1x1x128xf32>
    %157 = vector.shape_cast %156 : vector<1x1x128xf32> to vector<1x128xf32>
    %158 = vector.broadcast %157 : vector<1x128xf32> to vector<16x128xf32>
    %159 = arith.addf %155, %158 : vector<16x128xf32>
    %cst_52 = arith.constant 0.000000e+00 : f32
    %160 = vector.broadcast %cst_52 : f32 to vector<16x128xf32>
    %161 = arith.maximumf %159, %160 : vector<16x128xf32>
    %162 = arith.truncf %161 : vector<16x128xf32> to vector<16x128xbf16>
    %c0_53 = arith.constant 0 : index
    %c0_54 = arith.constant 0 : index
    %c0_55 = arith.constant 0 : index
    %163 = vector.load %arg14[%c0_53, %c0_54, %c0_55] : memref<1x128x32xbf16, #tpu.memory_space<vmem>>, vector<1x128x32xbf16>
    %164 = vector.shape_cast %163 : vector<1x128x32xbf16> to vector<128x32xbf16>
    %cst_56 = arith.constant dense<0.000000e+00> : vector<16x32xf32>
    %165 = tpu.matmul %162, %164, %cst_56 {dimension_numbers = #tpu.dot_dimension_numbers<[1], [0], [0], [1], [0, 0, 1, 1], [], []>} : vector<16x128xbf16>, vector<128x32xbf16>, vector<16x32xf32> -> vector<16x32xf32>
    %c0_57 = arith.constant 0 : index
    %c0_58 = arith.constant 0 : index
    %c0_59 = arith.constant 0 : index
    %166 = vector.load %arg15[%c0_57, %c0_58, %c0_59] : memref<1x1x32xf32, #tpu.memory_space<vmem>>, vector<1x1x32xf32>
    %167 = vector.shape_cast %166 : vector<1x1x32xf32> to vector<1x32xf32>
    %168 = vector.broadcast %167 : vector<1x32xf32> to vector<16x32xf32>
    %169 = arith.addf %165, %168 : vector<16x32xf32>
    %170 = arith.addf %151, %169 : vector<16x32xf32>
    %c0_60 = arith.constant 0 : index
    %c0_61 = arith.constant 0 : index
    %c0_62 = arith.constant 0 : index
    %171 = vector.load %arg16[%c0_60, %c0_61, %c0_62] : memref<1x1x32xf32, #tpu.memory_space<vmem>>, vector<1x1x32xf32>
    %172 = vector.shape_cast %171 : vector<1x1x32xf32> to vector<1x32xf32>
    %c0_63 = arith.constant 0 : index
    %c0_64 = arith.constant 0 : index
    %c0_65 = arith.constant 0 : index
    %173 = vector.load %arg17[%c0_63, %c0_64, %c0_65] : memref<1x1x32xf32, #tpu.memory_space<vmem>>, vector<1x1x32xf32>
    %174 = vector.shape_cast %173 : vector<1x1x32xf32> to vector<1x32xf32>
    %cst_66 = arith.constant dense<0.000000e+00> : vector<16xf32>
    %175 = vector.multi_reduction <add>, %170, %cst_66 [1] : vector<16x32xf32> to vector<16xf32>
    %176 = vector.shape_cast %175 : vector<16xf32> to vector<16x1xf32>
    %cst_67 = arith.constant 3.200000e+01 : f32
    %177 = vector.broadcast %cst_67 : f32 to vector<16x1xf32>
    %178 = arith.divf %176, %177 : vector<16x1xf32>
    %179 = vector.broadcast %178 : vector<16x1xf32> to vector<16x32xf32>
    %180 = arith.subf %170, %179 : vector<16x32xf32>
    %181 = arith.mulf %180, %180 : vector<16x32xf32>
    %cst_68 = arith.constant dense<0.000000e+00> : vector<16xf32>
    %182 = vector.multi_reduction <add>, %181, %cst_68 [1] : vector<16x32xf32> to vector<16xf32>
    %183 = vector.shape_cast %182 : vector<16xf32> to vector<16x1xf32>
    %cst_69 = arith.constant 3.200000e+01 : f32
    %184 = vector.broadcast %cst_69 : f32 to vector<16x1xf32>
    %185 = arith.divf %183, %184 : vector<16x1xf32>
    %186 = vector.broadcast %178 : vector<16x1xf32> to vector<16x32xf32>
    %187 = arith.subf %170, %186 : vector<16x32xf32>
    %cst_70 = arith.constant 9.99999974E-6 : f32
    %188 = vector.broadcast %cst_70 : f32 to vector<16x1xf32>
    %189 = arith.addf %185, %188 : vector<16x1xf32>
    %190 = math.rsqrt %189 : vector<16x1xf32>
    %191 = vector.broadcast %190 : vector<16x1xf32> to vector<16x32xf32>
    %192 = arith.mulf %187, %191 : vector<16x32xf32>
    %193 = vector.broadcast %172 : vector<1x32xf32> to vector<16x32xf32>
    %194 = arith.mulf %192, %193 : vector<16x32xf32>
    %195 = vector.broadcast %174 : vector<1x32xf32> to vector<16x32xf32>
    %196 = arith.addf %194, %195 : vector<16x32xf32>
    %c0_71 = arith.constant 0 : index
    %c0_72 = arith.constant 0 : index
    %197 = vector.load %arg21[%c0_71, %c0_72] : memref<16x32xf32, #tpu.memory_space<vmem>>, vector<16x32xf32>
    tpu.vector_store %arg21[%c0_71, %c0_72], %196 {strides = array<i32>} : memref<16x32xf32, #tpu.memory_space<vmem>>, vector<16x32xf32>,
    %c1_i32 = arith.constant 1 : i32
    %198 = arith.cmpi eq, %arg1, %c1_i32 : i32
    %199 = arith.extui %198 : i1 to i32
    %c0_i32_73 = arith.constant 0 : i32
    %200 = arith.cmpi ne, %199, %c0_i32_73 : i32
    scf.if %200 {
      %201 = arith.truncf %196 : vector<16x32xf32> to vector<16x32xbf16>
      %c0_74 = arith.constant 0 : index
      %c0_75 = arith.constant 0 : index
      %202 = vector.load %arg18[%c0_74, %c0_75] : memref<32x128xbf16, #tpu.memory_space<vmem>>, vector<32x128xbf16>
      %cst_76 = arith.constant dense<0.000000e+00> : vector<16x128xf32>
      %203 = tpu.matmul %201, %202, %cst_76 {dimension_numbers = #tpu.dot_dimension_numbers<[1], [0], [0], [1], [0, 0, 1, 1], [], []>} : vector<16x32xbf16>, vector<32x128xbf16>, vector<16x128xf32> -> vector<16x128xf32>
      %c0_77 = arith.constant 0 : index
      %c0_78 = arith.constant 0 : index
      %204 = vector.load %arg19[%c0_77, %c0_78] : memref<1x128xf32, #tpu.memory_space<vmem>>, vector<1x128xf32>
      %205 = vector.broadcast %204 : vector<1x128xf32> to vector<16x128xf32>
      %206 = arith.addf %203, %205 : vector<16x128xf32>
      %207 = vector.shape_cast %206 : vector<16x128xf32> to vector<2x8x128xf32>
      %c0_79 = arith.constant 0 : index
      %c0_80 = arith.constant 0 : index
      %c0_81 = arith.constant 0 : index
      %208 = vector.load %arg20[%c0_79, %c0_80, %c0_81] : memref<2x8x128xf32, #tpu.memory_space<vmem>>, vector<2x8x128xf32>
      tpu.vector_store %arg20[%c0_79, %c0_80, %c0_81], %207 {strides = array<i32>} : memref<2x8x128xf32, #tpu.memory_space<vmem>>, vector<2x8x128xf32>,
    } else {
    }
    return
  }
  func.func @transform_0(%arg0: i32, %arg1: i32) -> (i32, i32, i32) {
    %c0_i32 = arith.constant 0 : i32
    %c0_i32_0 = arith.constant 0 : i32
    %c0_i32_1 = arith.constant 0 : i32
    return %arg0, %c0_i32, %c0_i32_0 : i32, i32, i32
  }
  func.func @transform_1(%arg0: i32, %arg1: i32) -> (i32, i32, i32) {
    %c0_i32 = arith.constant 0 : i32
    %c0_i32_0 = arith.constant 0 : i32
    %c0_i32_1 = arith.constant 0 : i32
    %c0_i32_2 = arith.constant 0 : i32
    return %c0_i32, %c0_i32_0, %c0_i32_1 : i32, i32, i32
  }
  func.func @transform_2(%arg0: i32, %arg1: i32) -> (i32, i32) {
    %c0_i32 = arith.constant 0 : i32
    %c0_i32_0 = arith.constant 0 : i32
    %c0_i32_1 = arith.constant 0 : i32
    return %c0_i32, %c0_i32_0 : i32, i32
  }
  func.func @transform_3(%arg0: i32, %arg1: i32) -> (i32, i32) {
    %c0_i32 = arith.constant 0 : i32
    %c0_i32_0 = arith.constant 0 : i32
    %c0_i32_1 = arith.constant 0 : i32
    return %c0_i32, %c0_i32_0 : i32, i32
  }
  func.func @transform_4(%arg0: i32, %arg1: i32) -> (i32, i32, i32) {
    %c0_i32 = arith.constant 0 : i32
    %c0_i32_0 = arith.constant 0 : i32
    %c0_i32_1 = arith.constant 0 : i32
    return %arg1, %c0_i32, %c0_i32_0 : i32, i32, i32
  }
  func.func @transform_5(%arg0: i32, %arg1: i32) -> (i32, i32, i32) {
    %c0_i32 = arith.constant 0 : i32
    %c0_i32_0 = arith.constant 0 : i32
    %c0_i32_1 = arith.constant 0 : i32
    return %arg1, %c0_i32, %c0_i32_0 : i32, i32, i32
  }
  func.func @transform_6(%arg0: i32, %arg1: i32) -> (i32, i32, i32) {
    %c0_i32 = arith.constant 0 : i32
    %c0_i32_0 = arith.constant 0 : i32
    %c0_i32_1 = arith.constant 0 : i32
    return %arg1, %c0_i32, %c0_i32_0 : i32, i32, i32
  }
  func.func @transform_7(%arg0: i32, %arg1: i32) -> (i32, i32, i32) {
    %c0_i32 = arith.constant 0 : i32
    %c0_i32_0 = arith.constant 0 : i32
    %c0_i32_1 = arith.constant 0 : i32
    return %arg1, %c0_i32, %c0_i32_0 : i32, i32, i32
  }
  func.func @transform_8(%arg0: i32, %arg1: i32) -> (i32, i32, i32) {
    %c0_i32 = arith.constant 0 : i32
    %c0_i32_0 = arith.constant 0 : i32
    %c0_i32_1 = arith.constant 0 : i32
    return %arg1, %c0_i32, %c0_i32_0 : i32, i32, i32
  }
  func.func @transform_9(%arg0: i32, %arg1: i32) -> (i32, i32, i32) {
    %c0_i32 = arith.constant 0 : i32
    %c0_i32_0 = arith.constant 0 : i32
    %c0_i32_1 = arith.constant 0 : i32
    return %arg1, %c0_i32, %c0_i32_0 : i32, i32, i32
  }
  func.func @transform_10(%arg0: i32, %arg1: i32) -> (i32, i32, i32) {
    %c0_i32 = arith.constant 0 : i32
    %c0_i32_0 = arith.constant 0 : i32
    %c0_i32_1 = arith.constant 0 : i32
    return %arg1, %c0_i32, %c0_i32_0 : i32, i32, i32
  }
  func.func @transform_11(%arg0: i32, %arg1: i32) -> (i32, i32, i32) {
    %c0_i32 = arith.constant 0 : i32
    %c0_i32_0 = arith.constant 0 : i32
    %c0_i32_1 = arith.constant 0 : i32
    return %arg1, %c0_i32, %c0_i32_0 : i32, i32, i32
  }
  func.func @transform_12(%arg0: i32, %arg1: i32) -> (i32, i32, i32) {
    %c0_i32 = arith.constant 0 : i32
    %c0_i32_0 = arith.constant 0 : i32
    %c0_i32_1 = arith.constant 0 : i32
    return %arg1, %c0_i32, %c0_i32_0 : i32, i32, i32
  }
  func.func @transform_13(%arg0: i32, %arg1: i32) -> (i32, i32, i32) {
    %c0_i32 = arith.constant 0 : i32
    %c0_i32_0 = arith.constant 0 : i32
    %c0_i32_1 = arith.constant 0 : i32
    return %arg1, %c0_i32, %c0_i32_0 : i32, i32, i32
  }
  func.func @transform_14(%arg0: i32, %arg1: i32) -> (i32, i32, i32) {
    %c0_i32 = arith.constant 0 : i32
    %c0_i32_0 = arith.constant 0 : i32
    %c0_i32_1 = arith.constant 0 : i32
    return %arg1, %c0_i32, %c0_i32_0 : i32, i32, i32
  }
  func.func @transform_15(%arg0: i32, %arg1: i32) -> (i32, i32, i32) {
    %c0_i32 = arith.constant 0 : i32
    %c0_i32_0 = arith.constant 0 : i32
    %c0_i32_1 = arith.constant 0 : i32
    return %arg1, %c0_i32, %c0_i32_0 : i32, i32, i32
  }
  func.func @transform_16(%arg0: i32, %arg1: i32) -> (i32, i32) {
    %c0_i32 = arith.constant 0 : i32
    %c0_i32_0 = arith.constant 0 : i32
    %c0_i32_1 = arith.constant 0 : i32
    return %c0_i32, %c0_i32_0 : i32, i32
  }
  func.func @transform_17(%arg0: i32, %arg1: i32) -> (i32, i32) {
    %c0_i32 = arith.constant 0 : i32
    %c0_i32_0 = arith.constant 0 : i32
    %c0_i32_1 = arith.constant 0 : i32
    return %c0_i32, %c0_i32_0 : i32, i32
  }
  func.func @transform_18(%arg0: i32, %arg1: i32) -> (i32, i32, i32) {
    %c0_i32 = arith.constant 0 : i32
    %c0_i32_0 = arith.constant 0 : i32
    %c0_i32_1 = arith.constant 0 : i32
    return %arg0, %c0_i32, %c0_i32_0 : i32, i32, i32
  }
}

</mosaic_0001>

<llo_original>
// kernel: tpu_custom_call.1
$region0: #{tpu_custom_call.1}
  #allocation0 [shape = 'u32[]', space=smem, size = 0x4, offset = 0x4, fixed_abs, tag = 'smem constant byte address 0x4 - core index']
  #allocation1 [shape = 'u32[72,128]{1,0:T(1,128)}', space=vmem, size = 0x9000, scoped, tag = 'internal scratch']
  #allocation2 [shape = 'f32[16,32]{1,0:T(8,128)}', space=vmem, size = 0x2000, scoped, tag = 'scratch operand']
  %s0 = inlined_call_operand.vmem [shape: f32[2,8,8], index: 0, kind: input, shape index: {}]
  %s1 = inlined_call_operand.vmem [shape: f32[1,8,32], index: 1, kind: input, shape index: {}]
  %s2 = inlined_call_operand.vmem [shape: bf16[8,32], index: 2, kind: input, shape index: {}]
  %s3 = inlined_call_operand.vmem [shape: f32[1,32], index: 3, kind: input, shape index: {}]
  %s4 = inlined_call_operand.vmem [shape: bf16[2,32,96], index: 4, kind: input, shape index: {}]
  %s5 = inlined_call_operand.vmem [shape: f32[2,1,96], index: 5, kind: input, shape index: {}]
  %s6 = inlined_call_operand.vmem [shape: bf16[2,32,32], index: 6, kind: input, shape index: {}]
  %s7 = inlined_call_operand.vmem [shape: f32[2,1,32], index: 7, kind: input, shape index: {}]
  %s8 = inlined_call_operand.vmem [shape: f32[2,1,32], index: 8, kind: input, shape index: {}]
  %s9 = inlined_call_operand.vmem [shape: f32[2,1,32], index: 9, kind: input, shape index: {}]
  %s10 = inlined_call_operand.vmem [shape: bf16[2,32,128], index: 10, kind: input, shape index: {}]
  %s11 = inlined_call_operand.vmem [shape: f32[2,1,128], index: 11, kind: input, shape index: {}]
  %s12 = inlined_call_operand.vmem [shape: bf16[2,128,32], index: 12, kind: input, shape index: {}]
  %s13 = inlined_call_operand.vmem [shape: f32[2,1,32], index: 13, kind: input, shape index: {}]
  %s14 = inlined_call_operand.vmem [shape: f32[2,1,32], index: 14, kind: input, shape index: {}]
  %s15 = inlined_call_operand.vmem [shape: f32[2,1,32], index: 15, kind: input, shape index: {}]
  %s16 = inlined_call_operand.vmem [shape: bf16[32,128], index: 16, kind: input, shape index: {}]
  %s17 = inlined_call_operand.vmem [shape: f32[1,128], index: 17, kind: input, shape index: {}]
  %s18 = inlined_call_operand.hbm [shape: f32[2,8,128], index: 18, kind: output, shape index: {}]
  %s19 = sld [smem:[#allocation0]]
  $region113: #{tpu_custom_call.1} parent=0
    _
  %s21 = ssub.s32 1, %s19
  %s22 = scalar_select 0, %s21, %s19
  $region1: #{tpu_custom_call.1} parent=0
    #allocation3 [shape = 'u8[8192]{0}', space=vmem, size = 0x2000, scoped, tag = 'output window, operand 0, single buffered']
    #allocation4 [shape = 's32[2]{0}', space=sflag, size = 0x8, scoped, tag = 'scoped memory for tpu_custom_call.1']
    %23 = vsyncpa [#allocation4], 0
    loop: start=0, step=1, limit=4
    $region2: #{tpu_custom_call.1} parent=1 // loop_pre_header
      _
    $region3: #{tpu_custom_call.1} parent=1 // loop_header
      %s25 = sphi 0, %s29
      %p26 = scmp.ge.s32.totalorder %s25, 4
      %s32 = sphi 0, %s44
      %s33 = sphi 0, %s40
      %s34 = sphi 0, %s32
      %s35 = sphi 0, %s33
      %s36 = sphi 0, %s34
      %s37 = sphi 0, %s35
      %s47 = sphi 0, %s49
      %s50 = sphi 0, %s47
      %s51 = sphi 0, %s50
      %s67 = sphi 0, %s51
      %s71 = sphi 0, %s71
      %s73 = sphi 0, %s71
      %s74 = sphi 0, %s73
      %s88 = sphi 0, %s74
      %s92 = sphi 0, %s92
      %s94 = sphi 0, %s92
      %s95 = sphi 0, %s94
      %s109 = sphi 0, %s95
      %s113 = sphi 0, %s113
      %s115 = sphi 0, %s113
      %s116 = sphi 0, %s115
      %s130 = sphi 0, %s116
      %s136 = sphi 0, %s138
      %s139 = sphi 0, %s136
      %s140 = sphi 0, %s139
      %s156 = sphi 0, %s140
      %s162 = sphi 0, %s164
      %s165 = sphi 0, %s162
      %s166 = sphi 0, %s165
      %s182 = sphi 0, %s166
      %s188 = sphi 0, %s190
      %s191 = sphi 0, %s188
      %s192 = sphi 0, %s191
      %s208 = sphi 0, %s192
      %s214 = sphi 0, %s216
      %s217 = sphi 0, %s214
      %s218 = sphi 0, %s217
      %s234 = sphi 0, %s218
      %s240 = sphi 0, %s242
      %s243 = sphi 0, %s240
      %s244 = sphi 0, %s243
      %s260 = sphi 0, %s244
      %s266 = sphi 0, %s268
      %s269 = sphi 0, %s266
      %s270 = sphi 0, %s269
      %s286 = sphi 0, %s270
      %s292 = sphi 0, %s294
      %s295 = sphi 0, %s292
      %s296 = sphi 0, %s295
      %s312 = sphi 0, %s296
      %s318 = sphi 0, %s320
      %s321 = sphi 0, %s318
      %s322 = sphi 0, %s321
      %s338 = sphi 0, %s322
      %s344 = sphi 0, %s346
      %s347 = sphi 0, %s344
      %s348 = sphi 0, %s347
      %s364 = sphi 0, %s348
      %s370 = sphi 0, %s372
      %s373 = sphi 0, %s370
      %s374 = sphi 0, %s373
      %s390 = sphi 0, %s374
      %s396 = sphi 0, %s398
      %s399 = sphi 0, %s396
      %s400 = sphi 0, %s399
      %s416 = sphi 0, %s400
      %s422 = sphi 0, %s424
      %s425 = sphi 0, %s422
      %s426 = sphi 0, %s425
      %s442 = sphi 0, %s426
      %s446 = sphi 0, %s446
      %s448 = sphi 0, %s446
      %s449 = sphi 0, %s448
      %s463 = sphi 0, %s449
      %s467 = sphi 0, %s467
      %s469 = sphi 0, %s467
      %s470 = sphi 0, %s469
      %s484 = sphi 0, %s470
      %s490 = sphi 0, %s492
      %s493 = sphi 0, %s490
      %s494 = sphi 0, %s493
      %s510 = sphi 0, %s494
    $region4: #{tpu_custom_call.1} parent=1 // loop_header_branch
      %28 = sbr.rel (%p26) target = $region8
    $region5: #{tpu_custom_call.1} parent=1 // loop_body
      %s30 = ssub.s32 %s25, 1
      %s31 = ssub.s32 %s25, 2
      %s38 = sadd.s32 1, %s33
      %p39 = scmp.ge.s32.totalorder %s38, 2
      %s40 = scalar_select %p39, 0, %s38
      %s41 = sadd.s32 1, %s32
      %s42 = scalar_select %p39, %s41, %s32
      %p43 = scmp.ge.s32.totalorder %s42, 1
      %s44 = scalar_select %p43, 0, %s42
      %s45 = ssub.s32 %s32, %s44
      %p46 = scmp.eq.s32.totalorder %s45, 0
      %s48 = sadd.s32 %s47, 1
      %s49 = scalar_select %p46, %s47, %s48
      %p52 = pneg %p46
      %p53 = scmp.eq.s32.totalorder %s25, 1
      %p54 = por %p52, %p53
      %p55 = scmp.ne.s32.totalorder %s47, %s50
      %p56 = scmp.eq.s32.totalorder %s25, 0
      %p57 = por %p55, %p56
      %p58 = scmp.ne.s32.totalorder %s47, %s50
      %p59 = scmp.eq.s32.totalorder %s30, 1
      %p60 = por %p58, %p59
      %p61 = scmp.ne.s32.totalorder %s50, %s51
      %p62 = scmp.eq.s32.totalorder %s30, 0
      %p63 = por %p61, %p62
      %p64 = scmp.ne.s32.totalorder %s50, %s51
      %p65 = scmp.eq.s32.totalorder %s31, 1
      %p66 = por %p64, %p65
      %p68 = scmp.ne.s32.totalorder %s51, %s67
      %p69 = scmp.eq.s32.totalorder %s31, 0
      %p70 = por %p68, %p69
      %s72 = sadd.s32 %s71, 1
      %p75 = scmp.eq.s32.totalorder %s25, 1
      %p76 = scmp.ne.s32.totalorder %s71, %s73
      %p77 = scmp.eq.s32.totalorder %s25, 0
      %p78 = por %p76, %p77
      %p79 = scmp.ne.s32.totalorder %s71, %s73
      %p80 = scmp.eq.s32.totalorder %s30, 1
      %p81 = por %p79, %p80
      %p82 = scmp.ne.s32.totalorder %s73, %s74
      %p83 = scmp.eq.s32.totalorder %s30, 0
      %p84 = por %p82, %p83
      %p85 = scmp.ne.s32.totalorder %s73, %s74
      %p86 = scmp.eq.s32.totalorder %s31, 1
      %p87 = por %p85, %p86
      %p89 = scmp.ne.s32.totalorder %s74, %s88
      %p90 = scmp.eq.s32.totalorder %s31, 0
      %p91 = por %p89, %p90
      %s93 = sadd.s32 %s92, 1
      %p96 = scmp.eq.s32.totalorder %s25, 1
      %p97 = scmp.ne.s32.totalorder %s92, %s94
      %p98 = scmp.eq.s32.totalorder %s25, 0
      %p99 = por %p97, %p98
      %p100 = scmp.ne.s32.totalorder %s92, %s94
      %p101 = scmp.eq.s32.totalorder %s30, 1
      %p102 = por %p100, %p101
      %p103 = scmp.ne.s32.totalorder %s94, %s95
      %p104 = scmp.eq.s32.totalorder %s30, 0
      %p105 = por %p103, %p104
      %p106 = scmp.ne.s32.totalorder %s94, %s95
      %p107 = scmp.eq.s32.totalorder %s31, 1
      %p108 = por %p106, %p107
      %p110 = scmp.ne.s32.totalorder %s95, %s109
      %p111 = scmp.eq.s32.totalorder %s31, 0
      %p112 = por %p110, %p111
      %s114 = sadd.s32 %s113, 1
      %p117 = scmp.eq.s32.totalorder %s25, 1
      %p118 = scmp.ne.s32.totalorder %s113, %s115
      %p119 = scmp.eq.s32.totalorder %s25, 0
      %p120 = por %p118, %p119
      %p121 = scmp.ne.s32.totalorder %s113, %s115
      %p122 = scmp.eq.s32.totalorder %s30, 1
      %p123 = por %p121, %p122
      %p124 = scmp.ne.s32.totalorder %s115, %s116
      %p125 = scmp.eq.s32.totalorder %s30, 0
      %p126 = por %p124, %p125
      %p127 = scmp.ne.s32.totalorder %s115, %s116
      %p128 = scmp.eq.s32.totalorder %s31, 1
      %p129 = por %p127, %p128
      %p131 = scmp.ne.s32.totalorder %s116, %s130
      %p132 = scmp.eq.s32.totalorder %s31, 0
      %p133 = por %p131, %p132
      %s134 = ssub.s32 %s33, %s40
      %p135 = scmp.eq.s32.totalorder %s134, 0
      %s137 = sadd.s32 %s136, 1
      %s138 = scalar_select %p135, %s136, %s137
      %p141 = pneg %p135
      %p142 = scmp.eq.s32.totalorder %s25, 1
      %p143 = por %p141, %p142
      %p144 = scmp.ne.s32.totalorder %s136, %s139
      %p145 = scmp.eq.s32.totalorder %s25, 0
      %p146 = por %p144, %p145
      %p147 = scmp.ne.s32.totalorder %s136, %s139
      %p148 = scmp.eq.s32.totalorder %s30, 1
      %p149 = por %p147, %p148
      %p150 = scmp.ne.s32.totalorder %s139, %s140
      %p151 = scmp.eq.s32.totalorder %s30, 0
      %p152 = por %p150, %p151
      %p153 = scmp.ne.s32.totalorder %s139, %s140
      %p154 = scmp.eq.s32.totalorder %s31, 1
      %p155 = por %p153, %p154
      %p157 = scmp.ne.s32.totalorder %s140, %s156
      %p158 = scmp.eq.s32.totalorder %s31, 0
      %p159 = por %p157, %p158
      %s160 = ssub.s32 %s33, %s40
      %p161 = scmp.eq.s32.totalorder %s160, 0
      %s163 = sadd.s32 %s162, 1
      %s164 = scalar_select %p161, %s162, %s163
      %p167 = pneg %p161
      %p168 = scmp.eq.s32.totalorder %s25, 1
      %p169 = por %p167, %p168
      %p170 = scmp.ne.s32.totalorder %s162, %s165
      %p171 = scmp.eq.s32.totalorder %s25, 0
      %p172 = por %p170, %p171
      %p173 = scmp.ne.s32.totalorder %s162, %s165
      %p174 = scmp.eq.s32.totalorder %s30, 1
      %p175 = por %p173, %p174
      %p176 = scmp.ne.s32.totalorder %s165, %s166
      %p177 = scmp.eq.s32.totalorder %s30, 0
      %p178 = por %p176, %p177
      %p179 = scmp.ne.s32.totalorder %s165, %s166
      %p180 = scmp.eq.s32.totalorder %s31, 1
      %p181 = por %p179, %p180
      %p183 = scmp.ne.s32.totalorder %s166, %s182
      %p184 = scmp.eq.s32.totalorder %s31, 0
      %p185 = por %p183, %p184
      %s186 = ssub.s32 %s33, %s40
      %p187 = scmp.eq.s32.totalorder %s186, 0
      %s189 = sadd.s32 %s188, 1
      %s190 = scalar_select %p187, %s188, %s189
      %p193 = pneg %p187
      %p194 = scmp.eq.s32.totalorder %s25, 1
      %p195 = por %p193, %p194
      %p196 = scmp.ne.s32.totalorder %s188, %s191
      %p197 = scmp.eq.s32.totalorder %s25, 0
      %p198 = por %p196, %p197
      %p199 = scmp.ne.s32.totalorder %s188, %s191
      %p200 = scmp.eq.s32.totalorder %s30, 1
      %p201 = por %p199, %p200
      %p202 = scmp.ne.s32.totalorder %s191, %s192
      %p203 = scmp.eq.s32.totalorder %s30, 0
      %p204 = por %p202, %p203
      %p205 = scmp.ne.s32.totalorder %s191, %s192
      %p206 = scmp.eq.s32.totalorder %s31, 1
      %p207 = por %p205, %p206
      %p209 = scmp.ne.s32.totalorder %s192, %s208
      %p210 = scmp.eq.s32.totalorder %s31, 0
      %p211 = por %p209, %p210
      %s212 = ssub.s32 %s33, %s40
      %p213 = scmp.eq.s32.totalorder %s212, 0
      %s215 = sadd.s32 %s214, 1
      %s216 = scalar_select %p213, %s214, %s215
      %p219 = pneg %p213
      %p220 = scmp.eq.s32.totalorder %s25, 1
      %p221 = por %p219, %p220
      %p222 = scmp.ne.s32.totalorder %s214, %s217
      %p223 = scmp.eq.s32.totalorder %s25, 0
      %p224 = por %p222, %p223
      %p225 = scmp.ne.s32.totalorder %s214, %s217
      %p226 = scmp.eq.s32.totalorder %s30, 1
      %p227 = por %p225, %p226
      %p228 = scmp.ne.s32.totalorder %s217, %s218
      %p229 = scmp.eq.s32.totalorder %s30, 0
      %p230 = por %p228, %p229
      %p231 = scmp.ne.s32.totalorder %s217, %s218
      %p232 = scmp.eq.s32.totalorder %s31, 1
      %p233 = por %p231, %p232
      %p235 = scmp.ne.s32.totalorder %s218, %s234
      %p236 = scmp.eq.s32.totalorder %s31, 0
      %p237 = por %p235, %p236
      %s238 = ssub.s32 %s33, %s40
      %p239 = scmp.eq.s32.totalorder %s238, 0
      %s241 = sadd.s32 %s240, 1
      %s242 = scalar_select %p239, %s240, %s241
      %p245 = pneg %p239
      %p246 = scmp.eq.s32.totalorder %s25, 1
      %p247 = por %p245, %p246
      %p248 = scmp.ne.s32.totalorder %s240, %s243
      %p249 = scmp.eq.s32.totalorder %s25, 0
      %p250 = por %p248, %p249
      %p251 = scmp.ne.s32.totalorder %s240, %s243
      %p252 = scmp.eq.s32.totalorder %s30, 1
      %p253 = por %p251, %p252
      %p254 = scmp.ne.s32.totalorder %s243, %s244
      %p255 = scmp.eq.s32.totalorder %s30, 0
      %p256 = por %p254, %p255
      %p257 = scmp.ne.s32.totalorder %s243, %s244
      %p258 = scmp.eq.s32.totalorder %s31, 1
      %p259 = por %p257, %p258
      %p261 = scmp.ne.s32.totalorder %s244, %s260
      %p262 = scmp.eq.s32.totalorder %s31, 0
      %p263 = por %p261, %p262
      %s264 = ssub.s32 %s33, %s40
      %p265 = scmp.eq.s32.totalorder %s264, 0
      %s267 = sadd.s32 %s266, 1
      %s268 = scalar_select %p265, %s266, %s267
      %p271 = pneg %p265
      %p272 = scmp.eq.s32.totalorder %s25, 1
      %p273 = por %p271, %p272
      %p274 = scmp.ne.s32.totalorder %s266, %s269
      %p275 = scmp.eq.s32.totalorder %s25, 0
      %p276 = por %p274, %p275
      %p277 = scmp.ne.s32.totalorder %s266, %s269
      %p278 = scmp.eq.s32.totalorder %s30, 1
      %p279 = por %p277, %p278
      %p280 = scmp.ne.s32.totalorder %s269, %s270
      %p281 = scmp.eq.s32.totalorder %s30, 0
      %p282 = por %p280, %p281
      %p283 = scmp.ne.s32.totalorder %s269, %s270
      %p284 = scmp.eq.s32.totalorder %s31, 1
      %p285 = por %p283, %p284
      %p287 = scmp.ne.s32.totalorder %s270, %s286
      %p288 = scmp.eq.s32.totalorder %s31, 0
      %p289 = por %p287, %p288
      %s290 = ssub.s32 %s33, %s40
      %p291 = scmp.eq.s32.totalorder %s290, 0
      %s293 = sadd.s32 %s292, 1
      %s294 = scalar_select %p291, %s292, %s293
      %p297 = pneg %p291
      %p298 = scmp.eq.s32.totalorder %s25, 1
      %p299 = por %p297, %p298
      %p300 = scmp.ne.s32.totalorder %s292, %s295
      %p301 = scmp.eq.s32.totalorder %s25, 0
      %p302 = por %p300, %p301
      %p303 = scmp.ne.s32.totalorder %s292, %s295
      %p304 = scmp.eq.s32.totalorder %s30, 1
      %p305 = por %p303, %p304
      %p306 = scmp.ne.s32.totalorder %s295, %s296
      %p307 = scmp.eq.s32.totalorder %s30, 0
      %p308 = por %p306, %p307
      %p309 = scmp.ne.s32.totalorder %s295, %s296
      %p310 = scmp.eq.s32.totalorder %s31, 1
      %p311 = por %p309, %p310
      %p313 = scmp.ne.s32.totalorder %s296, %s312
      %p314 = scmp.eq.s32.totalorder %s31, 0
      %p315 = por %p313, %p314
      %s316 = ssub.s32 %s33, %s40
      %p317 = scmp.eq.s32.totalorder %s316, 0
      %s319 = sadd.s32 %s318, 1
      %s320 = scalar_select %p317, %s318, %s319
      %p323 = pneg %p317
      %p324 = scmp.eq.s32.totalorder %s25, 1
      %p325 = por %p323, %p324
      %p326 = scmp.ne.s32.totalorder %s318, %s321
      %p327 = scmp.eq.s32.totalorder %s25, 0
      %p328 = por %p326, %p327
      %p329 = scmp.ne.s32.totalorder %s318, %s321
      %p330 = scmp.eq.s32.totalorder %s30, 1
      %p331 = por %p329, %p330
      %p332 = scmp.ne.s32.totalorder %s321, %s322
      %p333 = scmp.eq.s32.totalorder %s30, 0
      %p334 = por %p332, %p333
      %p335 = scmp.ne.s32.totalorder %s321, %s322
      %p336 = scmp.eq.s32.totalorder %s31, 1
      %p337 = por %p335, %p336
      %p339 = scmp.ne.s32.totalorder %s322, %s338
      %p340 = scmp.eq.s32.totalorder %s31, 0
      %p341 = por %p339, %p340
      %s342 = ssub.s32 %s33, %s40
      %p343 = scmp.eq.s32.totalorder %s342, 0
      %s345 = sadd.s32 %s344, 1
      %s346 = scalar_select %p343, %s344, %s345
      %p349 = pneg %p343
      %p350 = scmp.eq.s32.totalorder %s25, 1
      %p351 = por %p349, %p350
      %p352 = scmp.ne.s32.totalorder %s344, %s347
      %p353 = scmp.eq.s32.totalorder %s25, 0
      %p354 = por %p352, %p353
      %p355 = scmp.ne.s32.totalorder %s344, %s347
      %p356 = scmp.eq.s32.totalorder %s30, 1
      %p357 = por %p355, %p356
      %p358 = scmp.ne.s32.totalorder %s347, %s348
      %p359 = scmp.eq.s32.totalorder %s30, 0
      %p360 = por %p358, %p359
      %p361 = scmp.ne.s32.totalorder %s347, %s348
      %p362 = scmp.eq.s32.totalorder %s31, 1
      %p363 = por %p361, %p362
      %p365 = scmp.ne.s32.totalorder %s348, %s364
      %p366 = scmp.eq.s32.totalorder %s31, 0
      %p367 = por %p365, %p366
      %s368 = ssub.s32 %s33, %s40
      %p369 = scmp.eq.s32.totalorder %s368, 0
      %s371 = sadd.s32 %s370, 1
      %s372 = scalar_select %p369, %s370, %s371
      %p375 = pneg %p369
      %p376 = scmp.eq.s32.totalorder %s25, 1
      %p377 = por %p375, %p376
      %p378 = scmp.ne.s32.totalorder %s370, %s373
      %p379 = scmp.eq.s32.totalorder %s25, 0
      %p380 = por %p378, %p379
      %p381 = scmp.ne.s32.totalorder %s370, %s373
      %p382 = scmp.eq.s32.totalorder %s30, 1
      %p383 = por %p381, %p382
      %p384 = scmp.ne.s32.totalorder %s373, %s374
      %p385 = scmp.eq.s32.totalorder %s30, 0
      %p386 = por %p384, %p385
      %p387 = scmp.ne.s32.totalorder %s373, %s374
      %p388 = scmp.eq.s32.totalorder %s31, 1
      %p389 = por %p387, %p388
      %p391 = scmp.ne.s32.totalorder %s374, %s390
      %p392 = scmp.eq.s32.totalorder %s31, 0
      %p393 = por %p391, %p392
      %s394 = ssub.s32 %s33, %s40
      %p395 = scmp.eq.s32.totalorder %s394, 0
      %s397 = sadd.s32 %s396, 1
      %s398 = scalar_select %p395, %s396, %s397
      %p401 = pneg %p395
      %p402 = scmp.eq.s32.totalorder %s25, 1
      %p403 = por %p401, %p402
      %p404 = scmp.ne.s32.totalorder %s396, %s399
      %p405 = scmp.eq.s32.totalorder %s25, 0
      %p406 = por %p404, %p405
      %p407 = scmp.ne.s32.totalorder %s396, %s399
      %p408 = scmp.eq.s32.totalorder %s30, 1
      %p409 = por %p407, %p408
      %p410 = scmp.ne.s32.totalorder %s399, %s400
      %p411 = scmp.eq.s32.totalorder %s30, 0
      %p412 = por %p410, %p411
      %p413 = scmp.ne.s32.totalorder %s399, %s400
      %p414 = scmp.eq.s32.totalorder %s31, 1
      %p415 = por %p413, %p414
      %p417 = scmp.ne.s32.totalorder %s400, %s416
      %p418 = scmp.eq.s32.totalorder %s31, 0
      %p419 = por %p417, %p418
      %s420 = ssub.s32 %s33, %s40
      %p421 = scmp.eq.s32.totalorder %s420, 0
      %s423 = sadd.s32 %s422, 1
      %s424 = scalar_select %p421, %s422, %s423
      %p427 = pneg %p421
      %p428 = scmp.eq.s32.totalorder %s25, 1
      %p429 = por %p427, %p428
      %p430 = scmp.ne.s32.totalorder %s422, %s425
      %p431 = scmp.eq.s32.totalorder %s25, 0
      %p432 = por %p430, %p431
      %p433 = scmp.ne.s32.totalorder %s422, %s425
      %p434 = scmp.eq.s32.totalorder %s30, 1
      %p435 = por %p433, %p434
      %p436 = scmp.ne.s32.totalorder %s425, %s426
      %p437 = scmp.eq.s32.totalorder %s30, 0
      %p438 = por %p436, %p437
      %p439 = scmp.ne.s32.totalorder %s425, %s426
      %p440 = scmp.eq.s32.totalorder %s31, 1
      %p441 = por %p439, %p440
      %p443 = scmp.ne.s32.totalorder %s426, %s442
      %p444 = scmp.eq.s32.totalorder %s31, 0
      %p445 = por %p443, %p444
      %s447 = sadd.s32 %s446, 1
      %p450 = scmp.eq.s32.totalorder %s25, 1
      %p451 = scmp.ne.s32.totalorder %s446, %s448
      %p452 = scmp.eq.s32.totalorder %s25, 0
      %p453 = por %p451, %p452
      %p454 = scmp.ne.s32.totalorder %s446, %s448
      %p455 = scmp.eq.s32.totalorder %s30, 1
      %p456 = por %p454, %p455
      %p457 = scmp.ne.s32.totalorder %s448, %s449
      %p458 = scmp.eq.s32.totalorder %s30, 0
      %p459 = por %p457, %p458
      %p460 = scmp.ne.s32.totalorder %s448, %s449
      %p461 = scmp.eq.s32.totalorder %s31, 1
      %p462 = por %p460, %p461
      %p464 = scmp.ne.s32.totalorder %s449, %s463
      %p465 = scmp.eq.s32.totalorder %s31, 0
      %p466 = por %p464, %p465
      %s468 = sadd.s32 %s467, 1
      %p471 = scmp.eq.s32.totalorder %s25, 1
      %p472 = scmp.ne.s32.totalorder %s467, %s469
      %p473 = scmp.eq.s32.totalorder %s25, 0
      %p474 = por %p472, %p473
      %p475 = scmp.ne.s32.totalorder %s467, %s469
      %p476 = scmp.eq.s32.totalorder %s30, 1
      %p477 = por %p475, %p476
      %p478 = scmp.ne.s32.totalorder %s469, %s470
      %p479 = scmp.eq.s32.totalorder %s30, 0
      %p480 = por %p478, %p479
      %p481 = scmp.ne.s32.totalorder %s469, %s470
      %p482 = scmp.eq.s32.totalorder %s31, 1
      %p483 = por %p481, %p482
      %p485 = scmp.ne.s32.totalorder %s470, %s484
      %p486 = scmp.eq.s32.totalorder %s31, 0
      %p487 = por %p485, %p486
      %s488 = ssub.s32 %s32, %s44
      %p489 = scmp.eq.s32.totalorder %s488, 0
      %s491 = sadd.s32 %s490, 1
      %s492 = scalar_select %p489, %s490, %s491
      %p495 = pneg %p489
      %p496 = scmp.eq.s32.totalorder %s25, 1
      %p497 = por %p495, %p496
      %p498 = scmp.ne.s32.totalorder %s490, %s493
      %p499 = scmp.eq.s32.totalorder %s25, 0
      %p500 = por %p498, %p499
      %p501 = scmp.ne.s32.totalorder %s490, %s493
      %p502 = scmp.eq.s32.totalorder %s30, 1
      %p503 = por %p501, %p502
      %p504 = scmp.ne.s32.totalorder %s493, %s494
      %p505 = scmp.eq.s32.totalorder %s30, 0
      %p506 = por %p504, %p505
      %p507 = scmp.ne.s32.totalorder %s493, %s494
      %p508 = scmp.eq.s32.totalorder %s31, 1
      %p509 = por %p507, %p508
      %p511 = scmp.ne.s32.totalorder %s494, %s510
      %p512 = scmp.eq.s32.totalorder %s31, 0
      %p513 = por %p511, %p512
      %p514 = scmp.le.s32.totalorder 1, %s25
      %p515 = scmp.lt.s32.totalorder %s25, 3
      %p516 = pnand %p514, %p515
      %p517 = pneg %p516
      // Predicated region
      $region9: #{tpu_custom_call.1} parent=5 // pred_check
        _
      $region10: #{tpu_custom_call.1} parent=5 // pred_check_branch
        %519 = sbr.rel (%p516) target = $region12
      $region11: #{tpu_custom_call.1} parent=5 // pred_region
        %s520 = ssub.s32 %s25, 1
        // Predicated region
        $region13: #{tpu_custom_call.1} parent=11 // pred_check
          %p521 = pneg %p63
        $region14: #{tpu_custom_call.1} parent=11 // pred_check_branch
          %523 = sbr.rel (%p521) target = $region16
        $region15: #{tpu_custom_call.1} parent=11 // pred_region
          %s524 = smul.u32 2, %s34
          %p525 = scmp.lt.s32.totalorder %s524, 1
          %s526 = scalar_select %p525, %s524, 1
          %s527 = smul.addr %s526, 8
          %s528 = scalar_lea.vmem %s0, %s527
          %s529 = smul.u32 2, %s34
        $region16: #{tpu_custom_call.1} parent=11 // pred_fallthru
          _
        // Predicated region
        $region17: #{tpu_custom_call.1} parent=11 // pred_check
          %p530 = pneg %p84
        $region18: #{tpu_custom_call.1} parent=11 // pred_check_branch
          %532 = sbr.rel (%p530) target = $region20
        $region19: #{tpu_custom_call.1} parent=11 // pred_region
          _
        $region20: #{tpu_custom_call.1} parent=11 // pred_fallthru
          _
        // Predicated region
        $region21: #{tpu_custom_call.1} parent=11 // pred_check
          %p533 = pneg %p105
        $region22: #{tpu_custom_call.1} parent=11 // pred_check_branch
          %535 = sbr.rel (%p533) target = $region24
        $region23: #{tpu_custom_call.1} parent=11 // pred_region
          _
        $region24: #{tpu_custom_call.1} parent=11 // pred_fallthru
          _
        // Predicated region
        $region25: #{tpu_custom_call.1} parent=11 // pred_check
          %p536 = pneg %p126
        $region26: #{tpu_custom_call.1} parent=11 // pred_check_branch
          %538 = sbr.rel (%p536) target = $region28
        $region27: #{tpu_custom_call.1} parent=11 // pred_region
          _
        $region28: #{tpu_custom_call.1} parent=11 // pred_fallthru
          _
        // Predicated region
        $region29: #{tpu_custom_call.1} parent=11 // pred_check
          %p539 = pneg %p459
        $region30: #{tpu_custom_call.1} parent=11 // pred_check_branch
          %541 = sbr.rel (%p539) target = $region32
        $region31: #{tpu_custom_call.1} parent=11 // pred_region
          _
        $region32: #{tpu_custom_call.1} parent=11 // pred_fallthru
          _
        // Predicated region
        $region33: #{tpu_custom_call.1} parent=11 // pred_check
          %p542 = pneg %p480
        $region34: #{tpu_custom_call.1} parent=11 // pred_check_branch
          %544 = sbr.rel (%p542) target = $region36
        $region35: #{tpu_custom_call.1} parent=11 // pred_region
          _
        $region36: #{tpu_custom_call.1} parent=11 // pred_fallthru
          _
      $region12: #{tpu_custom_call.1} parent=5 // pred_fallthru
        _
      %p545 = scmp.lt.s32.totalorder %s25, 2
      // Predicated region
      $region37: #{tpu_custom_call.1} parent=5 // pred_check
        %p546 = pneg %p545
      $region38: #{tpu_custom_call.1} parent=5 // pred_check_branch
        %548 = sbr.rel (%p546) target = $region40
      $region39: #{tpu_custom_call.1} parent=5 // pred_region
        // Predicated region
        $region41: #{tpu_custom_call.1} parent=39 // pred_check
          %p549 = pneg %p146
        $region42: #{tpu_custom_call.1} parent=39 // pred_check_branch
          %551 = sbr.rel (%p549) target = $region44
        $region43: #{tpu_custom_call.1} parent=39 // pred_region
          %p552 = scmp.lt.s32.totalorder %s33, 1
          %s553 = scalar_select %p552, %s33, 1
          %s554 = smul.addr %s553, 4
          %s555 = smul.addr %s554, 4
          %s556 = scalar_lea.vmem %s4, %s555
        $region44: #{tpu_custom_call.1} parent=39 // pred_fallthru
          _
        // Predicated region
        $region45: #{tpu_custom_call.1} parent=39 // pred_check
          %p557 = pneg %p172
        $region46: #{tpu_custom_call.1} parent=39 // pred_check_branch
          %559 = sbr.rel (%p557) target = $region48
        $region47: #{tpu_custom_call.1} parent=39 // pred_region
          %p560 = scmp.lt.s32.totalorder %s33, 1
          %s561 = scalar_select %p560, %s33, 1
          %s562 = scalar_lea.vmem %s5, %s561
        $region48: #{tpu_custom_call.1} parent=39 // pred_fallthru
          _
        // Predicated region
        $region49: #{tpu_custom_call.1} parent=39 // pred_check
          %p563 = pneg %p198
        $region50: #{tpu_custom_call.1} parent=39 // pred_check_branch
          %565 = sbr.rel (%p563) target = $region52
        $region51: #{tpu_custom_call.1} parent=39 // pred_region
          %p566 = scmp.lt.s32.totalorder %s33, 1
          %s567 = scalar_select %p566, %s33, 1
          %s568 = smul.addr %s567, 4
          %s569 = smul.addr %s568, 4
          %s570 = scalar_lea.vmem %s6, %s569
        $region52: #{tpu_custom_call.1} parent=39 // pred_fallthru
          _
        // Predicated region
        $region53: #{tpu_custom_call.1} parent=39 // pred_check
          %p571 = pneg %p224
        $region54: #{tpu_custom_call.1} parent=39 // pred_check_branch
          %573 = sbr.rel (%p571) target = $region56
        $region55: #{tpu_custom_call.1} parent=39 // pred_region
          %p574 = scmp.lt.s32.totalorder %s33, 1
          %s575 = scalar_select %p574, %s33, 1
          %s576 = scalar_lea.vmem %s7, %s575
        $region56: #{tpu_custom_call.1} parent=39 // pred_fallthru
          _
        // Predicated region
        $region57: #{tpu_custom_call.1} parent=39 // pred_check
          %p577 = pneg %p250
        $region58: #{tpu_custom_call.1} parent=39 // pred_check_branch
          %579 = sbr.rel (%p577) target = $region60
        $region59: #{tpu_custom_call.1} parent=39 // pred_region
          %p580 = scmp.lt.s32.totalorder %s33, 1
          %s581 = scalar_select %p580, %s33, 1
          %s582 = scalar_lea.vmem %s8, %s581
        $region60: #{tpu_custom_call.1} parent=39 // pred_fallthru
          _
        // Predicated region
        $region61: #{tpu_custom_call.1} parent=39 // pred_check
          %p583 = pneg %p276
        $region62: #{tpu_custom_call.1} parent=39 // pred_check_branch
          %585 = sbr.rel (%p583) target = $region64
        $region63: #{tpu_custom_call.1} parent=39 // pred_region
          %p586 = scmp.lt.s32.totalorder %s33, 1
          %s587 = scalar_select %p586, %s33, 1
          %s588 = scalar_lea.vmem %s9, %s587
        $region64: #{tpu_custom_call.1} parent=39 // pred_fallthru
          _
        // Predicated region
        $region65: #{tpu_custom_call.1} parent=39 // pred_check
          %p589 = pneg %p302
        $region66: #{tpu_custom_call.1} parent=39 // pred_check_branch
          %591 = sbr.rel (%p589) target = $region68
        $region67: #{tpu_custom_call.1} parent=39 // pred_region
          %p592 = scmp.lt.s32.totalorder %s33, 1
          %s593 = scalar_select %p592, %s33, 1
          %s594 = smul.addr %s593, 4
          %s595 = smul.addr %s594, 4
          %s596 = scalar_lea.vmem %s10, %s595
        $region68: #{tpu_custom_call.1} parent=39 // pred_fallthru
          _
        // Predicated region
        $region69: #{tpu_custom_call.1} parent=39 // pred_check
          %p597 = pneg %p328
        $region70: #{tpu_custom_call.1} parent=39 // pred_check_branch
          %599 = sbr.rel (%p597) target = $region72
        $region71: #{tpu_custom_call.1} parent=39 // pred_region
          %p600 = scmp.lt.s32.totalorder %s33, 1
          %s601 = scalar_select %p600, %s33, 1
          %s602 = scalar_lea.vmem %s11, %s601
        $region72: #{tpu_custom_call.1} parent=39 // pred_fallthru
          _
        // Predicated region
        $region73: #{tpu_custom_call.1} parent=39 // pred_check
          %p603 = pneg %p354
        $region74: #{tpu_custom_call.1} parent=39 // pred_check_branch
          %605 = sbr.rel (%p603) target = $region76
        $region75: #{tpu_custom_call.1} parent=39 // pred_region
          %p606 = scmp.lt.s32.totalorder %s33, 1
          %s607 = scalar_select %p606, %s33, 1
          %s608 = smul.addr %s607, 16
          %s609 = smul.addr %s608, 4
          %s610 = scalar_lea.vmem %s12, %s609
        $region76: #{tpu_custom_call.1} parent=39 // pred_fallthru
          _
        // Predicated region
        $region77: #{tpu_custom_call.1} parent=39 // pred_check
          %p611 = pneg %p380
        $region78: #{tpu_custom_call.1} parent=39 // pred_check_branch
          %613 = sbr.rel (%p611) target = $region80
        $region79: #{tpu_custom_call.1} parent=39 // pred_region
          %p614 = scmp.lt.s32.totalorder %s33, 1
          %s615 = scalar_select %p614, %s33, 1
          %s616 = scalar_lea.vmem %s13, %s615
        $region80: #{tpu_custom_call.1} parent=39 // pred_fallthru
          _
        // Predicated region
        $region81: #{tpu_custom_call.1} parent=39 // pred_check
          %p617 = pneg %p406
        $region82: #{tpu_custom_call.1} parent=39 // pred_check_branch
          %619 = sbr.rel (%p617) target = $region84
        $region83: #{tpu_custom_call.1} parent=39 // pred_region
          %p620 = scmp.lt.s32.totalorder %s33, 1
          %s621 = scalar_select %p620, %s33, 1
          %s622 = scalar_lea.vmem %s14, %s621
        $region84: #{tpu_custom_call.1} parent=39 // pred_fallthru
          _
        // Predicated region
        $region85: #{tpu_custom_call.1} parent=39 // pred_check
          %p623 = pneg %p432
        $region86: #{tpu_custom_call.1} parent=39 // pred_check_branch
          %625 = sbr.rel (%p623) target = $region88
        $region87: #{tpu_custom_call.1} parent=39 // pred_region
          %p626 = scmp.lt.s32.totalorder %s33, 1
          %s627 = scalar_select %p626, %s33, 1
          %s628 = scalar_lea.vmem %s15, %s627
        $region88: #{tpu_custom_call.1} parent=39 // pred_fallthru
          _
      $region40: #{tpu_custom_call.1} parent=5 // pred_fallthru
        _
      %p629 = scmp.le.s32.totalorder 1, %s25
      %p630 = scmp.lt.s32.totalorder %s25, 3
      %p631 = pnand %p629, %p630
      %p632 = pneg %p631
      // Predicated region
      $region89: #{tpu_custom_call.1} parent=5 // pred_check
        _
      $region90: #{tpu_custom_call.1} parent=5 // pred_check_branch
        %634 = sbr.rel (%p631) target = $region92
      $region91: #{tpu_custom_call.1} parent=5 // pred_region
        %s635 = ssub.s32 %s25, 1
        %s636 = smul.u32 2, %s34
        %p637 = scmp.lt.s32.totalorder %s636, 1
        %s638 = scalar_select %p637, %s636, 1
        %s639 = smul.addr %s638, 8
        %s640 = scalar_lea.vmem %s0, %s639
        %p641 = pneg %p63
        %p642 = pneg %p60
        %p643 = pneg %p84
        %p644 = pneg %p81
        %p645 = pneg %p105
        %p646 = pneg %p102
        %p647 = pneg %p126
        %p648 = pneg %p123
        %p649 = scmp.lt.s32.totalorder %s35, 1
        %s650 = scalar_select %p649, %s35, 1
        %s651 = smul.addr %s650, 4
        %s652 = smul.addr %s651, 4
        %s653 = scalar_lea.vmem %s4, %s652
        %p654 = pneg %p152
        %p655 = pneg %p149
        %p656 = scmp.lt.s32.totalorder %s35, 1
        %s657 = scalar_select %p656, %s35, 1
        %s658 = scalar_lea.vmem %s5, %s657
        %p659 = pneg %p178
        %p660 = pneg %p175
        %p661 = scmp.lt.s32.totalorder %s35, 1
        %s662 = scalar_select %p661, %s35, 1
        %s663 = smul.addr %s662, 4
        %s664 = smul.addr %s663, 4
        %s665 = scalar_lea.vmem %s6, %s664
        %p666 = pneg %p204
        %p667 = pneg %p201
        %p668 = scmp.lt.s32.totalorder %s35, 1
        %s669 = scalar_select %p668, %s35, 1
        %s670 = scalar_lea.vmem %s7, %s669
        %p671 = pneg %p230
        %p672 = pneg %p227
        %p673 = scmp.lt.s32.totalorder %s35, 1
        %s674 = scalar_select %p673, %s35, 1
        %s675 = scalar_lea.vmem %s8, %s674
        %p676 = pneg %p256
        %p677 = pneg %p253
        %p678 = scmp.lt.s32.totalorder %s35, 1
        %s679 = scalar_select %p678, %s35, 1
        %s680 = scalar_lea.vmem %s9, %s679
        %p681 = pneg %p282
        %p682 = pneg %p279
        %p683 = scmp.lt.s32.totalorder %s35, 1
        %s684 = scalar_select %p683, %s35, 1
        %s685 = smul.addr %s684, 4
        %s686 = smul.addr %s685, 4
        %s687 = scalar_lea.vmem %s10, %s686
        %p688 = pneg %p308
        %p689 = pneg %p305
        %p690 = scmp.lt.s32.totalorder %s35, 1
        %s691 = scalar_select %p690, %s35, 1
        %s692 = scalar_lea.vmem %s11, %s691
        %p693 = pneg %p334
        %p694 = pneg %p331
        %p695 = scmp.lt.s32.totalorder %s35, 1
        %s696 = scalar_select %p695, %s35, 1
        %s697 = smul.addr %s696, 16
        %s698 = smul.addr %s697, 4
        %s699 = scalar_lea.vmem %s12, %s698
        %p700 = pneg %p360
        %p701 = pneg %p357
        %p702 = scmp.lt.s32.totalorder %s35, 1
        %s703 = scalar_select %p702, %s35, 1
        %s704 = scalar_lea.vmem %s13, %s703
        %p705 = pneg %p386
        %p706 = pneg %p383
        %p707 = scmp.lt.s32.totalorder %s35, 1
        %s708 = scalar_select %p707, %s35, 1
        %s709 = scalar_lea.vmem %s14, %s708
        %p710 = pneg %p412
        %p711 = pneg %p409
        %p712 = scmp.lt.s32.totalorder %s35, 1
        %s713 = scalar_select %p712, %s35, 1
        %s714 = scalar_lea.vmem %s15, %s713
        %p715 = pneg %p438
        %p716 = pneg %p435
        %p717 = pneg %p459
        %p718 = pneg %p456
        %p719 = pneg %p480
        %p720 = pneg %p477
        %p721 = pneg %p506
        %p722 = pneg %p503
        %s723 = smul.u32 2, %s34
        %p724 = scmp.lt.s32.totalorder %s723, 1
        %s725 = scalar_select %p724, %s723, 1
        %s726 = smul.addr %s725, 8
        %s727 = scalar_lea.vmem %s0, %s726
        %s728 = smul.u32 2, %s34
        %p729 = scmp.lt.s32.totalorder %s35, 1
        %s730 = scalar_select %p729, %s35, 1
        %s731 = smul.addr %s730, 4
        %s732 = smul.addr %s731, 4
        %s733 = scalar_lea.vmem %s4, %s732
        %p734 = scmp.lt.s32.totalorder %s35, 1
        %s735 = scalar_select %p734, %s35, 1
        %s736 = scalar_lea.vmem %s5, %s735
        %p737 = scmp.lt.s32.totalorder %s35, 1
        %s738 = scalar_select %p737, %s35, 1
        %s739 = smul.addr %s738, 4
        %s740 = smul.addr %s739, 4
        %s741 = scalar_lea.vmem %s6, %s740
        %p742 = scmp.lt.s32.totalorder %s35, 1
        %s743 = scalar_select %p742, %s35, 1
        %s744 = scalar_lea.vmem %s7, %s743
        %p745 = scmp.lt.s32.totalorder %s35, 1
        %s746 = scalar_select %p745, %s35, 1
        %s747 = scalar_lea.vmem %s8, %s746
        %p748 = scmp.lt.s32.totalorder %s35, 1
        %s749 = scalar_select %p748, %s35, 1
        %s750 = scalar_lea.vmem %s9, %s749
        %p751 = scmp.lt.s32.totalorder %s35, 1
        %s752 = scalar_select %p751, %s35, 1
        %s753 = smul.addr %s752, 4
        %s754 = smul.addr %s753, 4
        %s755 = scalar_lea.vmem %s10, %s754
        %p756 = scmp.lt.s32.totalorder %s35, 1
        %s757 = scalar_select %p756, %s35, 1
        %s758 = scalar_lea.vmem %s11, %s757
        %p759 = scmp.lt.s32.totalorder %s35, 1
        %s760 = scalar_select %p759, %s35, 1
        %s761 = smul.addr %s760, 16
        %s762 = smul.addr %s761, 4
        %s763 = scalar_lea.vmem %s12, %s762
        %p764 = scmp.lt.s32.totalorder %s35, 1
        %s765 = scalar_select %p764, %s35, 1
        %s766 = scalar_lea.vmem %s13, %s765
        %p767 = scmp.lt.s32.totalorder %s35, 1
        %s768 = scalar_select %p767, %s35, 1
        %s769 = scalar_lea.vmem %s14, %s768
        %p770 = scmp.lt.s32.totalorder %s35, 1
        %s771 = scalar_select %p770, %s35, 1
        %s772 = scalar_lea.vmem %s15, %s771
        %s773 = smul.u32 2, %s34
        %p775 = scmp.eq.s32.totalorder %s35, 0
        // Predicated region
        $region93: #{tpu_custom_call.1} parent=91 // pred_check
          %p776 = pneg %p775
        $region94: #{tpu_custom_call.1} parent=91 // pred_check_branch
          %778 = sbr.rel (%p776) target = $region96
        $region95: #{tpu_custom_call.1} parent=91 // pred_region
          %v779 = vld [vmem:[%s727] sm:$0xff]
          %v780 = vld [vmem:[%s727 + $0x8] sm:$0xff]
          %v781 = vpack.c.bf16 %v780, %v779
          %v782 = vld [vmem:[%s2] sm:$0xf]
          %v783 = vld [vmem:[%s3] sm:$0x1]
          %v785 = vperm.slane %v783, 0
          %vm787 = vcmask 64512
          %v789 = vsel %vm787, %v781, 0
          %vm791 = vcmask 1043456
          %v793 = vsel %vm791, %v782, 0
          %795 = vmatpush.bf16.msra.mxu0 0
          %796 = vmatpush.bf16.msra.mxu0 0
          %797 = vmatpush.bf16.msra.mxu0 0
          %798 = vmatpush.bf16.msra.mxu0 0
          %799 = vmatpush.bf16.msra.mxu0 0
          %800 = vmatpush.bf16.msra.mxu0 0
          %801 = vmatpush.bf16.msra.mxu0 0
          %802 = vmatpush.bf16.msra.mxu0 %v793
          %803 = vmatmul.bf16.gmra.mxu0 %v789
          %v804 = vpop.f32.mrf.mxu0
          %v805 = vadd.f32 %v785, %v804
          %v806 = vpop.f32.mrf.mxu0
          %v807 = vadd.f32 %v785, %v806
          %808 = vdwg.mxu0
          %v809 = vld [vmem:[%s1] sm:$0xff]
          %v810 = vadd.f32 %v805, %v809
          %v811 = vadd.f32 %v807, %v809
          %vm812 = vcmask 261120
          %813 = vst.msk [vmem:[#allocation2] sm:$0xff] %vm812, %v810
          %814 = vst.msk [vmem:[#allocation2 + $0x8] sm:$0xff] %vm812, %v811
        $region96: #{tpu_custom_call.1} parent=91 // pred_fallthru
          _
        %v815 = vld [vmem:[#allocation2] sm:$0xff]
        %v816 = vld [vmem:[#allocation2 + $0x8] sm:$0xff]
        %v817 = vpack.c.bf16 %v816, %v815
        %v818 = vld [vmem:[%s733] sm:$0xf]
        %v819 = vld [vmem:[%s733 + $0x4] sm:$0xf]
        %v820 = vld [vmem:[%s733 + $0x8] sm:$0xf]
        %v821 = vld [vmem:[%s733 + $0xc] sm:$0xf]
        %v822 = vld [vmem:[%s736] sm:$0x1]
        %v824 = vperm.slane %v822, 0
        %v830 = vunpack.c.l.b16 %v818
        %v831 = vunpack.c.l.b16 %v819
        %v832 = vunpack.c.l.b16 %v820
        %v833 = vunpack.c.l.b16 %v821
        %v834 = vpack.c.b16 %v831, %v830
        %v835 = vpack.c.b16 %v833, %v832
        %vm838 = vcmask 261120
        %v840 = vsel %vm838, %v817, 0
        %842 = vmatpush.bf16.msra.mxu0 0
        %843 = vmatpush.bf16.msra.mxu0 0
        %844 = vmatpush.bf16.msra.mxu0 0
        %845 = vmatpush.bf16.msra.mxu0 0
        %846 = vmatpush.bf16.msra.mxu0 0
        %847 = vmatpush.bf16.msra.mxu0 0
        %848 = vmatpush.bf16.msra.mxu0 %v835
        %849 = vmatpush.bf16.msra.mxu0 %v834
        %850 = vmatmul.bf16.gmra.mxu0 %v840
        %v851 = vpop.f32.mrf.mxu0
        %v852 = vadd.f32 %v824, %v851
        %v853 = vpop.f32.mrf.mxu0
        %v854 = vadd.f32 %v824, %v853
        %855 = vdwg.mxu0
        %v856 = vld [vmem:[%s741] sm:$0xf]
        %v857 = vld [vmem:[%s741 + $0x4] sm:$0xf]
        %v858 = vld [vmem:[%s741 + $0x8] sm:$0xf]
        %v859 = vld [vmem:[%s741 + $0xc] sm:$0xf]
        %v860 = vpack.c.bf16 %v852, %v852
        %v861 = vpack.c.bf16 %v854, %v854
        %v863 = vunpack.c.l.b16 %v860
        %v864 = vpack.c.b16 %v863, %v863
        %865 = vrot.lane.b32.xlu0 %v864, 96
        %v866 = vpop.permute.xlu0 %865
        %vm867 = vcmask 64512
        %v869 = vsel %vm867, %v860, 0
        %v872 = vsel %vm867, %v866, 0
        %874 = vmatpush.bf16.xpose.msra.mxu0 0
        %875 = vmatpush.bf16.xpose.msra.mxu0 0
        %876 = vmatpush.bf16.xpose.msra.mxu0 0
        %877 = vmatpush.bf16.xpose.msra.mxu0 0
        %878 = vmatpush.bf16.xpose.msra.mxu0 0
        %879 = vmatpush.bf16.xpose.msra.mxu0 0
        %880 = vmatpush.bf16.xpose.msra.mxu0 0
        %881 = vmatpush.bf16.xpose.msra.mxu0 %v872
        %882 = vmatmul.bf16.gmra.mxu0 %v869
        %v883 = vpop.f32.mrf.mxu0
        %v884 = vadd.f32 0.0, %v883
        %v885 = vpop.f32.mrf.mxu0
        %886 = vdwg.mxu0
        %v888 = vunpack.c.l.b16 %v861
        %v889 = vpack.c.b16 %v888, %v888
        %890 = vrot.lane.b32.xlu0 %v889, 96
        %v891 = vpop.permute.xlu0 %890
        %v893 = vsel %vm867, %v861, 0
        %v896 = vsel %vm867, %v891, 0
        %898 = vmatpush.bf16.xpose.msra.mxu0 0
        %899 = vmatpush.bf16.xpose.msra.mxu0 0
        %900 = vmatpush.bf16.xpose.msra.mxu0 0
        %901 = vmatpush.bf16.xpose.msra.mxu0 0
        %902 = vmatpush.bf16.xpose.msra.mxu0 0
        %903 = vmatpush.bf16.xpose.msra.mxu0 0
        %904 = vmatpush.bf16.xpose.msra.mxu0 0
        %905 = vmatpush.bf16.xpose.msra.mxu0 %v896
        %906 = vmatmul.bf16.gmra.mxu0 %v893
        %v907 = vpop.f32.mrf.mxu0
        %v908 = vadd.f32 0.0, %v907
        %v909 = vpop.f32.mrf.mxu0
        %910 = vdwg.mxu0
        %v911 = vsel %vm867, %v884, -inf
        %912 = vmax.xlane.f32.xlu0 %v911
        %v913 = vpop.xlane.xlu0 %912
        %v914 = vsel %vm867, %v908, -inf
        %915 = vmax.xlane.f32.xlu0 %v914
        %v916 = vpop.xlane.xlu0 %915
        %v917 = vsub.f32 %v884, %v913
        %v918 = vsub.f32 %v908, %v916
        %v919 = vmul.f32 %v917, 1.442695
        %v920 = vpow.pop %v919
        %v921 = vmul.f32 %v918, 1.442695
        %v922 = vpow.pop %v921
        %v923 = vsel %vm867, %v920, 0.0
        %924 = vadd.xlane.f32.xlu0 %v923
        %v925 = vpop.xlane.xlu0 %924
        %v926 = vsel %vm867, %v922, 0.0
        %927 = vadd.xlane.f32.xlu0 %v926
        %v928 = vpop.xlane.xlu0 %927
        %v929 = vrcp.pop %v925
        %v930 = vrcp.pop %v928
        %v931 = vmul.f32 %v920, %v929
        %v932 = vmul.f32 %v922, %v930
        %v933 = vpack.c.bf16 %v931, %v931
        %v934 = vpack.c.bf16 %v932, %v932
        %935 = vrot.lane.b32.xlu0 %v864, 64
        %v936 = vpop.permute.xlu0 %935
        %v938 = vsel %vm867, %v933, 0
        %vm940 = vcmask 1043456
        %v942 = vsel %vm940, %v936, 0
        %944 = vmatpush.bf16.msra.mxu0 0
        %945 = vmatpush.bf16.msra.mxu0 0
        %946 = vmatpush.bf16.msra.mxu0 0
        %947 = vmatpush.bf16.msra.mxu0 0
        %948 = vmatpush.bf16.msra.mxu0 0
        %949 = vmatpush.bf16.msra.mxu0 0
        %950 = vmatpush.bf16.msra.mxu0 0
        %951 = vmatpush.bf16.msra.mxu0 %v942
        %952 = vmatmul.bf16.gmra.mxu0 %v938
        %v953 = vpop.f32.mrf.mxu0
        %v954 = vadd.f32 0.0, %v953
        %v955 = vpop.f32.mrf.mxu0
        %956 = vdwg.mxu0
        %957 = vrot.lane.b32.xlu0 %v889, 64
        %v958 = vpop.permute.xlu0 %957
        %v960 = vsel %vm867, %v934, 0
        %v963 = vsel %vm940, %v958, 0
        %965 = vmatpush.bf16.msra.mxu0 0
        %966 = vmatpush.bf16.msra.mxu0 0
        %967 = vmatpush.bf16.msra.mxu0 0
        %968 = vmatpush.bf16.msra.mxu0 0
        %969 = vmatpush.bf16.msra.mxu0 0
        %970 = vmatpush.bf16.msra.mxu0 0
        %971 = vmatpush.bf16.msra.mxu0 0
        %972 = vmatpush.bf16.msra.mxu0 %v963
        %973 = vmatmul.bf16.gmra.mxu0 %v960
        %v974 = vpop.f32.mrf.mxu0
        %v975 = vadd.f32 0.0, %v974
        %v976 = vpop.f32.mrf.mxu0
        %977 = vdwg.mxu0
        %v978 = vpack.c.bf16 %v975, %v954
        %979 = vrot.lane.b32.xlu0 %v864, 120
        %v980 = vpop.permute.xlu0 %979
        %981 = vrot.lane.b32.xlu0 %v864, 88
        %v982 = vpop.permute.xlu0 %981
        %v984 = vsel %vm867, %v980, 0
        %v987 = vsel %vm867, %v982, 0
        %989 = vmatpush.bf16.xpose.msra.mxu0 0
        %990 = vmatpush.bf16.xpose.msra.mxu0 0
        %991 = vmatpush.bf16.xpose.msra.mxu0 0
        %992 = vmatpush.bf16.xpose.msra.mxu0 0
        %993 = vmatpush.bf16.xpose.msra.mxu0 0
        %994 = vmatpush.bf16.xpose.msra.mxu0 0
        %995 = vmatpush.bf16.xpose.msra.mxu0 0
        %996 = vmatpush.bf16.xpose.msra.mxu0 %v987
        %997 = vmatmul.bf16.gmra.mxu0 %v984
        %v998 = vpop.f32.mrf.mxu0
        %v999 = vadd.f32 0.0, %v998
        %v1000 = vpop.f32.mrf.mxu0
        %1001 = vdwg.mxu0
        %1002 = vrot.lane.b32.xlu0 %v889, 120
        %v1003 = vpop.permute.xlu0 %1002
        %1004 = vrot.lane.b32.xlu0 %v889, 88
        %v1005 = vpop.permute.xlu0 %1004
        %v1007 = vsel %vm867, %v1003, 0
        %v1010 = vsel %vm867, %v1005, 0
        %1012 = vmatpush.bf16.xpose.msra.mxu0 0
        %1013 = vmatpush.bf16.xpose.msra.mxu0 0
        %1014 = vmatpush.bf16.xpose.msra.mxu0 0
        %1015 = vmatpush.bf16.xpose.msra.mxu0 0
        %1016 = vmatpush.bf16.xpose.msra.mxu0 0
        %1017 = vmatpush.bf16.xpose.msra.mxu0 0
        %1018 = vmatpush.bf16.xpose.msra.mxu0 0
        %1019 = vmatpush.bf16.xpose.msra.mxu0 %v1010
        %1020 = vmatmul.bf16.gmra.mxu0 %v1007
        %v1021 = vpop.f32.mrf.mxu0
        %v1022 = vadd.f32 0.0, %v1021
        %v1023 = vpop.f32.mrf.mxu0
        %1024 = vdwg.mxu0
        %v1025 = vsel %vm867, %v999, -inf
        %1026 = vmax.xlane.f32.xlu0 %v1025
        %v1027 = vpop.xlane.xlu0 %1026
        %v1028 = vsel %vm867, %v1022, -inf
        %1029 = vmax.xlane.f32.xlu0 %v1028
        %v1030 = vpop.xlane.xlu0 %1029
        %v1031 = vsub.f32 %v999, %v1027
        %v1032 = vsub.f32 %v1022, %v1030
        %v1033 = vmul.f32 %v1031, 1.442695
        %v1034 = vpow.pop %v1033
        %v1035 = vmul.f32 %v1032, 1.442695
        %v1036 = vpow.pop %v1035
        %v1037 = vsel %vm867, %v1034, 0.0
        %1038 = vadd.xlane.f32.xlu0 %v1037
        %v1039 = vpop.xlane.xlu0 %1038
        %v1040 = vsel %vm867, %v1036, 0.0
        %1041 = vadd.xlane.f32.xlu0 %v1040
        %v1042 = vpop.xlane.xlu0 %1041
        %v1043 = vrcp.pop %v1039
        %v1044 = vrcp.pop %v1042
        %v1045 = vmul.f32 %v1034, %v1043
        %v1046 = vmul.f32 %v1036, %v1044
        %v1047 = vpack.c.bf16 %v1045, %v1045
        %v1048 = vpack.c.bf16 %v1046, %v1046
        %1049 = vrot.lane.b32.xlu0 %v864, 56
        %v1050 = vpop.permute.xlu0 %1049
        %v1052 = vsel %vm867, %v1047, 0
        %v1055 = vsel %vm940, %v1050, 0
        %1057 = vmatpush.bf16.msra.mxu0 0
        %1058 = vmatpush.bf16.msra.mxu0 0
        %1059 = vmatpush.bf16.msra.mxu0 0
        %1060 = vmatpush.bf16.msra.mxu0 0
        %1061 = vmatpush.bf16.msra.mxu0 0
        %1062 = vmatpush.bf16.msra.mxu0 0
        %1063 = vmatpush.bf16.msra.mxu0 0
        %1064 = vmatpush.bf16.msra.mxu0 %v1055
        %1065 = vmatmul.bf16.gmra.mxu0 %v1052
        %v1066 = vpop.f32.mrf.mxu0
        %v1067 = vadd.f32 0.0, %v1066
        %v1068 = vpop.f32.mrf.mxu0
        %1069 = vdwg.mxu0
        %1070 = vrot.lane.b32.xlu0 %v889, 56
        %v1071 = vpop.permute.xlu0 %1070
        %v1073 = vsel %vm867, %v1048, 0
        %v1076 = vsel %vm940, %v1071, 0
        %1078 = vmatpush.bf16.msra.mxu0 0
        %1079 = vmatpush.bf16.msra.mxu0 0
        %1080 = vmatpush.bf16.msra.mxu0 0
        %1081 = vmatpush.bf16.msra.mxu0 0
        %1082 = vmatpush.bf16.msra.mxu0 0
        %1083 = vmatpush.bf16.msra.mxu0 0
        %1084 = vmatpush.bf16.msra.mxu0 0
        %1085 = vmatpush.bf16.msra.mxu0 %v1076
        %1086 = vmatmul.bf16.gmra.mxu0 %v1073
        %v1087 = vpop.f32.mrf.mxu0
        %v1088 = vadd.f32 0.0, %v1087
        %v1089 = vpop.f32.mrf.mxu0
        %1090 = vdwg.mxu0
        %v1091 = vpack.c.bf16 %v1088, %v1067
        %v1093 = vsel %vm867, %v1091, 0
        %v1096 = vsel %vm940, %v857, 0
        %1098 = vmatpush.bf16.msra.mxu0 0
        %1099 = vmatpush.bf16.msra.mxu0 0
        %1100 = vmatpush.bf16.msra.mxu0 0
        %1101 = vmatpush.bf16.msra.mxu0 0
        %1102 = vmatpush.bf16.msra.mxu0 0
        %1103 = vmatpush.bf16.msra.mxu0 0
        %1104 = vmatpush.bf16.msra.mxu0 0
        %1105 = vmatpush.bf16.msra.mxu0 %v1096
        %1106 = vmatmul.bf16.gmra.mxu0 %v1093
        %v1107 = vpop.f32.mrf.mxu0
        %v1108 = vadd.f32 0.0, %v1107
        %v1109 = vpop.f32.mrf.mxu0
        %v1110 = vadd.f32 0.0, %v1109
        %1111 = vdwg.mxu0
        %v1113 = vsel %vm867, %v978, 0
        %v1116 = vsel %vm940, %v856, 0
        %1118 = vmatpush.bf16.msra.mxu0 0
        %1119 = vmatpush.bf16.msra.mxu0 0
        %1120 = vmatpush.bf16.msra.mxu0 0
        %1121 = vmatpush.bf16.msra.mxu0 0
        %1122 = vmatpush.bf16.msra.mxu0 0
        %1123 = vmatpush.bf16.msra.mxu0 0
        %1124 = vmatpush.bf16.msra.mxu0 0
        %1125 = vmatpush.bf16.msra.mxu0 %v1116
        %1126 = vmatmul.bf16.gmra.mxu0 %v1113
        %v1127 = vpop.f32.mrf.mxu0
        %v1128 = vadd.f32 %v1108, %v1127
        %v1129 = vpop.f32.mrf.mxu0
        %v1130 = vadd.f32 %v1110, %v1129
        %1131 = vdwg.mxu0
        %1132 = vrot.lane.b32.xlu0 %v864, 112
        %v1133 = vpop.permute.xlu0 %1132
        %1134 = vrot.lane.b32.xlu0 %v864, 80
        %v1135 = vpop.permute.xlu0 %1134
        %v1137 = vsel %vm867, %v1133, 0
        %v1140 = vsel %vm867, %v1135, 0
        %1142 = vmatpush.bf16.xpose.msra.mxu0 0
        %1143 = vmatpush.bf16.xpose.msra.mxu0 0
        %1144 = vmatpush.bf16.xpose.msra.mxu0 0
        %1145 = vmatpush.bf16.xpose.msra.mxu0 0
        %1146 = vmatpush.bf16.xpose.msra.mxu0 0
        %1147 = vmatpush.bf16.xpose.msra.mxu0 0
        %1148 = vmatpush.bf16.xpose.msra.mxu0 0
        %1149 = vmatpush.bf16.xpose.msra.mxu0 %v1140
        %1150 = vmatmul.bf16.gmra.mxu0 %v1137
        %v1151 = vpop.f32.mrf.mxu0
        %v1152 = vadd.f32 0.0, %v1151
        %v1153 = vpop.f32.mrf.mxu0
        %1154 = vdwg.mxu0
        %1155 = vrot.lane.b32.xlu0 %v889, 112
        %v1156 = vpop.permute.xlu0 %1155
        %1157 = vrot.lane.b32.xlu0 %v889, 80
        %v1158 = vpop.permute.xlu0 %1157
        %v1160 = vsel %vm867, %v1156, 0
        %v1163 = vsel %vm867, %v1158, 0
        %1165 = vmatpush.bf16.xpose.msra.mxu0 0
        %1166 = vmatpush.bf16.xpose.msra.mxu0 0
        %1167 = vmatpush.bf16.xpose.msra.mxu0 0
        %1168 = vmatpush.bf16.xpose.msra.mxu0 0
        %1169 = vmatpush.bf16.xpose.msra.mxu0 0
        %1170 = vmatpush.bf16.xpose.msra.mxu0 0
        %1171 = vmatpush.bf16.xpose.msra.mxu0 0
        %1172 = vmatpush.bf16.xpose.msra.mxu0 %v1163
        %1173 = vmatmul.bf16.gmra.mxu0 %v1160
        %v1174 = vpop.f32.mrf.mxu0
        %v1175 = vadd.f32 0.0, %v1174
        %v1176 = vpop.f32.mrf.mxu0
        %1177 = vdwg.mxu0
        %v1178 = vsel %vm867, %v1152, -inf
        %1179 = vmax.xlane.f32.xlu0 %v1178
        %v1180 = vpop.xlane.xlu0 %1179
        %v1181 = vsel %vm867, %v1175, -inf
        %1182 = vmax.xlane.f32.xlu0 %v1181
        %v1183 = vpop.xlane.xlu0 %1182
        %v1184 = vsub.f32 %v1152, %v1180
        %v1185 = vsub.f32 %v1175, %v1183
        %v1186 = vmul.f32 %v1184, 1.442695
        %v1187 = vpow.pop %v1186
        %v1188 = vmul.f32 %v1185, 1.442695
        %v1189 = vpow.pop %v1188
        %v1190 = vsel %vm867, %v1187, 0.0
        %1191 = vadd.xlane.f32.xlu0 %v1190
        %v1192 = vpop.xlane.xlu0 %1191
        %v1193 = vsel %vm867, %v1189, 0.0
        %1194 = vadd.xlane.f32.xlu0 %v1193
        %v1195 = vpop.xlane.xlu0 %1194
        %v1196 = vrcp.pop %v1192
        %v1197 = vrcp.pop %v1195
        %v1198 = vmul.f32 %v1187, %v1196
        %v1199 = vmul.f32 %v1189, %v1197
        %v1200 = vpack.c.bf16 %v1198, %v1198
        %v1201 = vpack.c.bf16 %v1199, %v1199
        %1202 = vrot.lane.b32.xlu0 %v864, 48
        %v1203 = vpop.permute.xlu0 %1202
        %v1205 = vsel %vm867, %v1200, 0
        %v1208 = vsel %vm940, %v1203, 0
        %1210 = vmatpush.bf16.msra.mxu0 0
        %1211 = vmatpush.bf16.msra.mxu0 0
        %1212 = vmatpush.bf16.msra.mxu0 0
        %1213 = vmatpush.bf16.msra.mxu0 0
        %1214 = vmatpush.bf16.msra.mxu0 0
        %1215 = vmatpush.bf16.msra.mxu0 0
        %1216 = vmatpush.bf16.msra.mxu0 0
        %1217 = vmatpush.bf16.msra.mxu0 %v1208
        %1218 = vmatmul.bf16.gmra.mxu0 %v1205
        %v1219 = vpop.f32.mrf.mxu0
        %v1220 = vadd.f32 0.0, %v1219
        %v1221 = vpop.f32.mrf.mxu0
        %1222 = vdwg.mxu0
        %1223 = vrot.lane.b32.xlu0 %v889, 48
        %v1224 = vpop.permute.xlu0 %1223
        %v1226 = vsel %vm867, %v1201, 0
        %v1229 = vsel %vm940, %v1224, 0
        %1231 = vmatpush.bf16.msra.mxu0 0
        %1232 = vmatpush.bf16.msra.mxu0 0
        %1233 = vmatpush.bf16.msra.mxu0 0
        %1234 = vmatpush.bf16.msra.mxu0 0
        %1235 = vmatpush.bf16.msra.mxu0 0
        %1236 = vmatpush.bf16.msra.mxu0 0
        %1237 = vmatpush.bf16.msra.mxu0 0
        %1238 = vmatpush.bf16.msra.mxu0 %v1229
        %1239 = vmatmul.bf16.gmra.mxu0 %v1226
        %v1240 = vpop.f32.mrf.mxu0
        %v1241 = vadd.f32 0.0, %v1240
        %v1242 = vpop.f32.mrf.mxu0
        %1243 = vdwg.mxu0
        %v1244 = vpack.c.bf16 %v1241, %v1220
        %v1246 = vsel %vm867, %v1244, 0
        %v1249 = vsel %vm940, %v858, 0
        %1251 = vmatpush.bf16.msra.mxu0 0
        %1252 = vmatpush.bf16.msra.mxu0 0
        %1253 = vmatpush.bf16.msra.mxu0 0
        %1254 = vmatpush.bf16.msra.mxu0 0
        %1255 = vmatpush.bf16.msra.mxu0 0
        %1256 = vmatpush.bf16.msra.mxu0 0
        %1257 = vmatpush.bf16.msra.mxu0 0
        %1258 = vmatpush.bf16.msra.mxu0 %v1249
        %1259 = vmatmul.bf16.gmra.mxu0 %v1246
        %v1260 = vpop.f32.mrf.mxu0
        %v1261 = vadd.f32 0.0, %v1260
        %v1262 = vpop.f32.mrf.mxu0
        %v1263 = vadd.f32 0.0, %v1262
        %1264 = vdwg.mxu0
        %v1265 = vadd.f32 %v1128, %v1261
        %v1266 = vadd.f32 %v1130, %v1263
        %1267 = vrot.lane.b32.xlu0 %v864, 104
        %v1268 = vpop.permute.xlu0 %1267
        %1269 = vrot.lane.b32.xlu0 %v864, 72
        %v1270 = vpop.permute.xlu0 %1269
        %v1272 = vsel %vm867, %v1268, 0
        %v1275 = vsel %vm867, %v1270, 0
        %1277 = vmatpush.bf16.xpose.msra.mxu0 0
        %1278 = vmatpush.bf16.xpose.msra.mxu0 0
        %1279 = vmatpush.bf16.xpose.msra.mxu0 0
        %1280 = vmatpush.bf16.xpose.msra.mxu0 0
        %1281 = vmatpush.bf16.xpose.msra.mxu0 0
        %1282 = vmatpush.bf16.xpose.msra.mxu0 0
        %1283 = vmatpush.bf16.xpose.msra.mxu0 0
        %1284 = vmatpush.bf16.xpose.msra.mxu0 %v1275
        %1285 = vmatmul.bf16.gmra.mxu0 %v1272
        %v1286 = vpop.f32.mrf.mxu0
        %v1287 = vadd.f32 0.0, %v1286
        %v1288 = vpop.f32.mrf.mxu0
        %1289 = vdwg.mxu0
        %1290 = vrot.lane.b32.xlu0 %v889, 104
        %v1291 = vpop.permute.xlu0 %1290
        %1292 = vrot.lane.b32.xlu0 %v889, 72
        %v1293 = vpop.permute.xlu0 %1292
        %v1295 = vsel %vm867, %v1291, 0
        %v1298 = vsel %vm867, %v1293, 0
        %1300 = vmatpush.bf16.xpose.msra.mxu0 0
        %1301 = vmatpush.bf16.xpose.msra.mxu0 0
        %1302 = vmatpush.bf16.xpose.msra.mxu0 0
        %1303 = vmatpush.bf16.xpose.msra.mxu0 0
        %1304 = vmatpush.bf16.xpose.msra.mxu0 0
        %1305 = vmatpush.bf16.xpose.msra.mxu0 0
        %1306 = vmatpush.bf16.xpose.msra.mxu0 0
        %1307 = vmatpush.bf16.xpose.msra.mxu0 %v1298
        %1308 = vmatmul.bf16.gmra.mxu0 %v1295
        %v1309 = vpop.f32.mrf.mxu0
        %v1310 = vadd.f32 0.0, %v1309
        %v1311 = vpop.f32.mrf.mxu0
        %1312 = vdwg.mxu0
        %v1313 = vsel %vm867, %v1287, -inf
        %1314 = vmax.xlane.f32.xlu0 %v1313
        %v1315 = vpop.xlane.xlu0 %1314
        %v1316 = vsel %vm867, %v1310, -inf
        %1317 = vmax.xlane.f32.xlu0 %v1316
        %v1318 = vpop.xlane.xlu0 %1317
        %v1319 = vsub.f32 %v1287, %v1315
        %v1320 = vsub.f32 %v1310, %v1318
        %v1321 = vmul.f32 %v1319, 1.442695
        %v1322 = vpow.pop %v1321
        %v1323 = vmul.f32 %v1320, 1.442695
        %v1324 = vpow.pop %v1323
        %v1325 = vsel %vm867, %v1322, 0.0
        %1326 = vadd.xlane.f32.xlu0 %v1325
        %v1327 = vpop.xlane.xlu0 %1326
        %v1328 = vsel %vm867, %v1324, 0.0
        %1329 = vadd.xlane.f32.xlu0 %v1328
        %v1330 = vpop.xlane.xlu0 %1329
        %v1331 = vrcp.pop %v1327
        %v1332 = vrcp.pop %v1330
        %v1333 = vmul.f32 %v1322, %v1331
        %v1334 = vmul.f32 %v1324, %v1332
        %v1335 = vpack.c.bf16 %v1333, %v1333
        %v1336 = vpack.c.bf16 %v1334, %v1334
        %1337 = vrot.lane.b32.xlu0 %v864, 40
        %v1338 = vpop.permute.xlu0 %1337
        %v1340 = vsel %vm867, %v1335, 0
        %v1343 = vsel %vm940, %v1338, 0
        %1345 = vmatpush.bf16.msra.mxu0 0
        %1346 = vmatpush.bf16.msra.mxu0 0
        %1347 = vmatpush.bf16.msra.mxu0 0
        %1348 = vmatpush.bf16.msra.mxu0 0
        %1349 = vmatpush.bf16.msra.mxu0 0
        %1350 = vmatpush.bf16.msra.mxu0 0
        %1351 = vmatpush.bf16.msra.mxu0 0
        %1352 = vmatpush.bf16.msra.mxu0 %v1343
        %1353 = vmatmul.bf16.gmra.mxu0 %v1340
        %v1354 = vpop.f32.mrf.mxu0
        %v1355 = vadd.f32 0.0, %v1354
        %v1356 = vpop.f32.mrf.mxu0
        %1357 = vdwg.mxu0
        %1358 = vrot.lane.b32.xlu0 %v889, 40
        %v1359 = vpop.permute.xlu0 %1358
        %v1361 = vsel %vm867, %v1336, 0
        %v1364 = vsel %vm940, %v1359, 0
        %1366 = vmatpush.bf16.msra.mxu0 0
        %1367 = vmatpush.bf16.msra.mxu0 0
        %1368 = vmatpush.bf16.msra.mxu0 0
        %1369 = vmatpush.bf16.msra.mxu0 0
        %1370 = vmatpush.bf16.msra.mxu0 0
        %1371 = vmatpush.bf16.msra.mxu0 0
        %1372 = vmatpush.bf16.msra.mxu0 0
        %1373 = vmatpush.bf16.msra.mxu0 %v1364
        %1374 = vmatmul.bf16.gmra.mxu0 %v1361
        %v1375 = vpop.f32.mrf.mxu0
        %v1376 = vadd.f32 0.0, %v1375
        %v1377 = vpop.f32.mrf.mxu0
        %1378 = vdwg.mxu0
        %v1379 = vpack.c.bf16 %v1376, %v1355
        %v1381 = vsel %vm867, %v1379, 0
        %v1384 = vsel %vm940, %v859, 0
        %1386 = vmatpush.bf16.msra.mxu0 0
        %1387 = vmatpush.bf16.msra.mxu0 0
        %1388 = vmatpush.bf16.msra.mxu0 0
        %1389 = vmatpush.bf16.msra.mxu0 0
        %1390 = vmatpush.bf16.msra.mxu0 0
        %1391 = vmatpush.bf16.msra.mxu0 0
        %1392 = vmatpush.bf16.msra.mxu0 0
        %1393 = vmatpush.bf16.msra.mxu0 %v1384
        %1394 = vmatmul.bf16.gmra.mxu0 %v1381
        %v1395 = vpop.f32.mrf.mxu0
        %v1396 = vadd.f32 0.0, %v1395
        %v1397 = vpop.f32.mrf.mxu0
        %v1398 = vadd.f32 0.0, %v1397
        %1399 = vdwg.mxu0
        %v1400 = vadd.f32 %v1265, %v1396
        %v1401 = vadd.f32 %v1266, %v1398
        %v1402 = vld [vmem:[%s744] sm:$0x1]
        %v1404 = vperm.slane %v1402, 0
        %v1406 = vadd.f32 %v1400, %v1404
        %v1407 = vadd.f32 %v1401, %v1404
        %v1408 = vadd.f32 %v815, %v1406
        %v1409 = vadd.f32 %v816, %v1407
        %v1410 = vld [vmem:[%s747] sm:$0x1]
        %v1411 = vld [vmem:[%s750] sm:$0x1]
        %v1412 = vsel %vm838, %v1408, 0.0
        %1413 = vadd.xlane.f32.xlu0 %v1412
        %v1414 = vpop.xlane.xlu0 %1413
        %v1415 = vsel %vm838, %v1409, 0.0
        %1416 = vadd.xlane.f32.xlu0 %v1415
        %v1417 = vpop.xlane.xlu0 %1416
        %v1418 = vrcp.pop 32.0
        %v1419 = vmul.f32 32.0, %v1418
        %v1420 = vsub.f32 1.0, %v1419
        %v1421 = vmul.f32 %v1418, %v1420
        %v1422 = vadd.f32 %v1418, %v1421
        %vm1423 = vweird.f32 %v1418
        %v1424 = vsel %vm1423, %v1418, %v1422
        %v1425 = vmul.f32 %v1414, %v1424
        %v1426 = vmul.f32 %v1417, %v1424
        %v1427 = vsub.f32 %v1408, %v1425
        %v1428 = vsub.f32 %v1409, %v1426
        %v1429 = vmul.f32 %v1427, %v1427
        %v1430 = vmul.f32 %v1428, %v1428
        %v1431 = vsel %vm838, %v1429, 0.0
        %1432 = vadd.xlane.f32.xlu0 %v1431
        %v1433 = vpop.xlane.xlu0 %1432
        %v1434 = vsel %vm838, %v1430, 0.0
        %1435 = vadd.xlane.f32.xlu0 %v1434
        %v1436 = vpop.xlane.xlu0 %1435
        %v1437 = vmul.f32 %v1433, %v1424
        %v1438 = vmul.f32 %v1436, %v1424
        %v1439 = vadd.f32 %v1437, 1e-05
        %v1440 = vadd.f32 %v1438, 1e-05
        %v1441 = vrsqrt.pop %v1439
        %v1442 = vmul.f32 %v1441, %v1439
        %v1443 = vmul.f32 %v1442, %v1441
        %v1444 = vmul.f32 0.5, %v1443
        %v1445 = vsub.f32 1.5, %v1444
        %v1446 = vmul.f32 %v1441, %v1445
        %vm1447 = vweird.f32 %v1439
        %vm1448 = vweird.f32 %v1441
        %vm1449 = vmor %vm1447, %vm1448
        %v1450 = vsel %vm1449, %v1441, %v1446
        %v1451 = vrsqrt.pop %v1440
        %v1452 = vmul.f32 %v1451, %v1440
        %v1453 = vmul.f32 %v1452, %v1451
        %v1454 = vmul.f32 0.5, %v1453
        %v1455 = vsub.f32 1.5, %v1454
        %v1456 = vmul.f32 %v1451, %v1455
        %vm1457 = vweird.f32 %v1440
        %vm1458 = vweird.f32 %v1451
        %vm1459 = vmor %vm1457, %vm1458
        %v1460 = vsel %vm1459, %v1451, %v1456
        %v1461 = vmul.f32 %v1427, %v1450
        %v1462 = vmul.f32 %v1428, %v1460
        %v1464 = vperm.slane %v1410, 0
        %v1466 = vmul.f32 %v1461, %v1464
        %v1467 = vmul.f32 %v1462, %v1464
        %v1469 = vperm.slane %v1411, 0
        %v1471 = vadd.f32 %v1466, %v1469
        %v1472 = vadd.f32 %v1467, %v1469
        %v1473 = vpack.c.bf16 %v1472, %v1471
        %v1474 = vld [vmem:[%s755] sm:$0xf]
        %v1475 = vld [vmem:[%s755 + $0x4] sm:$0xf]
        %v1476 = vld [vmem:[%s755 + $0x8] sm:$0xf]
        %v1477 = vld [vmem:[%s755 + $0xc] sm:$0xf]
        %v1478 = vld [vmem:[%s758] sm:$0x1]
        %v1480 = vperm.slane %v1478, 0
        %v1486 = vunpack.c.l.b16 %v1474
        %v1487 = vunpack.c.l.b16 %v1475
        %v1488 = vunpack.c.l.b16 %v1476
        %v1489 = vunpack.c.l.b16 %v1477
        %v1490 = vpack.c.b16 %v1487, %v1486
        %v1491 = vpack.c.b16 %v1489, %v1488
        %v1495 = vsel %vm838, %v1473, 0
        %1497 = vmatpush.bf16.msra.mxu0 0
        %1498 = vmatpush.bf16.msra.mxu0 0
        %1499 = vmatpush.bf16.msra.mxu0 0
        %1500 = vmatpush.bf16.msra.mxu0 0
        %1501 = vmatpush.bf16.msra.mxu0 0
        %1502 = vmatpush.bf16.msra.mxu0 0
        %1503 = vmatpush.bf16.msra.mxu0 %v1491
        %1504 = vmatpush.bf16.msra.mxu0 %v1490
        %1505 = vmatmul.bf16.gmra.mxu0 %v1495
        %v1506 = vpop.f32.mrf.mxu0
        %v1507 = vadd.f32 %v1480, %v1506
        %v1508 = vpop.f32.mrf.mxu0
        %v1509 = vadd.f32 %v1480, %v1508
        %1510 = vdwg.mxu0
        %v1511 = vmax.f32 %v1507, 0.0
        %v1512 = vmax.f32 %v1509, 0.0
        %v1513 = vpack.c.bf16 %v1512, %v1511
        %v1514 = vld [vmem:[%s763] sm:$0xf]
        %v1515 = vld [vmem:[%s763 + $0x4] sm:$0xf]
        %v1516 = vld [vmem:[%s763 + $0x8] sm:$0xf]
        %v1517 = vld [vmem:[%s763 + $0xc] sm:$0xf]
        %v1518 = vld [vmem:[%s763 + $0x10] sm:$0xf]
        %v1519 = vld [vmem:[%s763 + $0x14] sm:$0xf]
        %v1520 = vld [vmem:[%s763 + $0x18] sm:$0xf]
        %v1521 = vld [vmem:[%s763 + $0x1c] sm:$0xf]
        %v1522 = vld [vmem:[%s763 + $0x20] sm:$0xf]
        %v1523 = vld [vmem:[%s763 + $0x24] sm:$0xf]
        %v1524 = vld [vmem:[%s763 + $0x28] sm:$0xf]
        %v1525 = vld [vmem:[%s763 + $0x2c] sm:$0xf]
        %v1526 = vld [vmem:[%s763 + $0x30] sm:$0xf]
        %v1527 = vld [vmem:[%s763 + $0x34] sm:$0xf]
        %v1528 = vld [vmem:[%s763 + $0x38] sm:$0xf]
        %v1529 = vld [vmem:[%s763 + $0x3c] sm:$0xf]
        %v1530 = vld [vmem:[%s766] sm:$0x1]
        %v1532 = vperm.slane %v1530, 0
        %v1550 = vunpack.c.l.b16 %v1514
        %v1551 = vunpack.c.l.b16 %v1515
        %v1552 = vunpack.c.l.b16 %v1516
        %v1553 = vunpack.c.l.b16 %v1517
        %v1554 = vunpack.c.l.b16 %v1518
        %v1555 = vunpack.c.l.b16 %v1519
        %v1556 = vunpack.c.l.b16 %v1520
        %v1557 = vunpack.c.l.b16 %v1521
        %v1558 = vunpack.c.l.b16 %v1522
        %v1559 = vunpack.c.l.b16 %v1523
        %v1560 = vunpack.c.l.b16 %v1524
        %v1561 = vunpack.c.l.b16 %v1525
        %v1562 = vunpack.c.l.b16 %v1526
        %v1563 = vunpack.c.l.b16 %v1527
        %v1564 = vunpack.c.l.b16 %v1528
        %v1565 = vunpack.c.l.b16 %v1529
        %v1566 = vpack.c.b16 %v1551, %v1550
        %v1567 = vpack.c.b16 %v1553, %v1552
        %v1568 = vpack.c.b16 %v1555, %v1554
        %v1569 = vpack.c.b16 %v1557, %v1556
        %v1570 = vpack.c.b16 %v1559, %v1558
        %v1571 = vpack.c.b16 %v1561, %v1560
        %v1572 = vpack.c.b16 %v1563, %v1562
        %v1573 = vpack.c.b16 %v1565, %v1564
        %1582 = vmatpush.bf16.msra.mxu0 %v1573
        %1583 = vmatpush.bf16.msra.mxu0 %v1572
        %1584 = vmatpush.bf16.msra.mxu0 %v1571
        %1585 = vmatpush.bf16.msra.mxu0 %v1570
        %1586 = vmatpush.bf16.msra.mxu0 %v1569
        %1587 = vmatpush.bf16.msra.mxu0 %v1568
        %1588 = vmatpush.bf16.msra.mxu0 %v1567
        %1589 = vmatpush.bf16.msra.mxu0 %v1566
        %1590 = vmatmul.bf16.gmra.mxu0 %v1513
        %v1591 = vpop.f32.mrf.mxu0
        %v1592 = vadd.f32 %v1532, %v1591
        %v1593 = vpop.f32.mrf.mxu0
        %v1594 = vadd.f32 %v1532, %v1593
        %1595 = vdwg.mxu0
        %v1596 = vadd.f32 %v1471, %v1592
        %v1597 = vadd.f32 %v1472, %v1594
        %v1598 = vld [vmem:[%s769] sm:$0x1]
        %v1599 = vld [vmem:[%s772] sm:$0x1]
        %v1600 = vsel %vm838, %v1596, 0.0
        %1601 = vadd.xlane.f32.xlu0 %v1600
        %v1602 = vpop.xlane.xlu0 %1601
        %v1603 = vsel %vm838, %v1597, 0.0
        %1604 = vadd.xlane.f32.xlu0 %v1603
        %v1605 = vpop.xlane.xlu0 %1604
        %v1606 = vmul.f32 %v1602, %v1424
        %v1607 = vmul.f32 %v1605, %v1424
        %v1608 = vsub.f32 %v1596, %v1606
        %v1609 = vsub.f32 %v1597, %v1607
        %v1610 = vmul.f32 %v1608, %v1608
        %v1611 = vmul.f32 %v1609, %v1609
        %v1612 = vsel %vm838, %v1610, 0.0
        %1613 = vadd.xlane.f32.xlu0 %v1612
        %v1614 = vpop.xlane.xlu0 %1613
        %v1615 = vsel %vm838, %v1611, 0.0
        %1616 = vadd.xlane.f32.xlu0 %v1615
        %v1617 = vpop.xlane.xlu0 %1616
        %v1618 = vmul.f32 %v1614, %v1424
        %v1619 = vmul.f32 %v1617, %v1424
        %v1620 = vadd.f32 %v1618, 1e-05
        %v1621 = vadd.f32 %v1619, 1e-05
        %v1622 = vrsqrt.pop %v1620
        %v1623 = vmul.f32 %v1622, %v1620
        %v1624 = vmul.f32 %v1623, %v1622
        %v1625 = vmul.f32 0.5, %v1624
        %v1626 = vsub.f32 1.5, %v1625
        %v1627 = vmul.f32 %v1622, %v1626
        %vm1628 = vweird.f32 %v1620
        %vm1629 = vweird.f32 %v1622
        %vm1630 = vmor %vm1628, %vm1629
        %v1631 = vsel %vm1630, %v1622, %v1627
        %v1632 = vrsqrt.pop %v1621
        %v1633 = vmul.f32 %v1632, %v1621
        %v1634 = vmul.f32 %v1633, %v1632
        %v1635 = vmul.f32 0.5, %v1634
        %v1636 = vsub.f32 1.5, %v1635
        %v1637 = vmul.f32 %v1632, %v1636
        %vm1638 = vweird.f32 %v1621
        %vm1639 = vweird.f32 %v1632
        %vm1640 = vmor %vm1638, %vm1639
        %v1641 = vsel %vm1640, %v1632, %v1637
        %v1642 = vmul.f32 %v1608, %v1631
        %v1643 = vmul.f32 %v1609, %v1641
        %v1645 = vperm.slane %v1598, 0
        %v1647 = vmul.f32 %v1642, %v1645
        %v1648 = vmul.f32 %v1643, %v1645
        %v1650 = vperm.slane %v1599, 0
        %v1652 = vadd.f32 %v1647, %v1650
        %v1653 = vadd.f32 %v1648, %v1650
        %1654 = vst.msk [vmem:[#allocation2] sm:$0xff] %vm838, %v1652
        %1655 = vst.msk [vmem:[#allocation2 + $0x8] sm:$0xff] %vm838, %v1653
        %p1656 = scmp.eq.s32.totalorder %s35, 1
        // Predicated region
        $region97: #{tpu_custom_call.1} parent=91 // pred_check
          %p1657 = pneg %p1656
        $region98: #{tpu_custom_call.1} parent=91 // pred_check_branch
          %1659 = sbr.rel (%p1657) target = $region100
        $region99: #{tpu_custom_call.1} parent=91 // pred_region
          %v1660 = vpack.c.bf16 %v1653, %v1652
          %v1661 = vld [vmem:[%s16] sm:$0xf]
          %v1662 = vld [vmem:[%s16 + $0x4] sm:$0xf]
          %v1663 = vld [vmem:[%s16 + $0x8] sm:$0xf]
          %v1664 = vld [vmem:[%s16 + $0xc] sm:$0xf]
          %v1665 = vld [vmem:[%s17] sm:$0x1]
          %v1667 = vperm.slane %v1665, 0
          %v1673 = vunpack.c.l.b16 %v1661
          %v1674 = vunpack.c.l.b16 %v1662
          %v1675 = vunpack.c.l.b16 %v1663
          %v1676 = vunpack.c.l.b16 %v1664
          %v1677 = vpack.c.b16 %v1674, %v1673
          %v1678 = vpack.c.b16 %v1676, %v1675
          %v1682 = vsel %vm838, %v1660, 0
          %1684 = vmatpush.bf16.msra.mxu0 0
          %1685 = vmatpush.bf16.msra.mxu0 0
          %1686 = vmatpush.bf16.msra.mxu0 0
          %1687 = vmatpush.bf16.msra.mxu0 0
          %1688 = vmatpush.bf16.msra.mxu0 0
          %1689 = vmatpush.bf16.msra.mxu0 0
          %1690 = vmatpush.bf16.msra.mxu0 %v1678
          %1691 = vmatpush.bf16.msra.mxu0 %v1677
          %1692 = vmatmul.bf16.gmra.mxu0 %v1682
          %v1693 = vpop.f32.mrf.mxu0
          %v1694 = vadd.f32 %v1667, %v1693
          %v1695 = vpop.f32.mrf.mxu0
          %v1696 = vadd.f32 %v1667, %v1695
          %1697 = vdwg.mxu0
          %1698 = vst [vmem:[#allocation3] sm:$0xff] %v1694
          %1699 = vst [vmem:[#allocation3 + $0x8] sm:$0xff] %v1696
        $region100: #{tpu_custom_call.1} parent=91 // pred_fallthru
          _
        // Predicated region
        $region101: #{tpu_custom_call.1} parent=91 // pred_check
          %p1700 = pneg %p503
        $region102: #{tpu_custom_call.1} parent=91 // pred_check_branch
          %1702 = sbr.rel (%p1700) target = $region104
        $region103: #{tpu_custom_call.1} parent=91 // pred_region
          %s1703 = smul.u32 2, %s34
          %1705 = vsyncadd [#allocation4], 0
          %s1706 = smul.addr %s1703, 8
          %s1707 = scalar_lea.hbm %s18, %s1706
          %s1708 = sshll.u32 [#allocation3], 4
          %s1709 = int_to_ptr.vmem [resolvable:$true] %s1708
          %s1710 = sshll.u32 %s1707, 4
          %s1711 = int_to_ptr.hbm [resolvable:$true] %s1710
          %1716 = dma.vmem_to_hbm [thread:$0]  %s1709, 256, %s1711, [#allocation4], 128, 128, 8
        $region104: #{tpu_custom_call.1} parent=91 // pred_fallthru
          _
        // Predicated region
        $region105: #{tpu_custom_call.1} parent=91 // pred_check
          %p1717 = pneg %p503
        $region106: #{tpu_custom_call.1} parent=91 // pred_check_branch
          %1719 = sbr.rel (%p1717) target = $region108
        $region107: #{tpu_custom_call.1} parent=91 // pred_region
          %1721 = dma.done [#allocation4], 256
        $region108: #{tpu_custom_call.1} parent=91 // pred_fallthru
          _
      $region92: #{tpu_custom_call.1} parent=5 // pred_fallthru
        _
      %p1722 = scmp.le.s32.totalorder 2, %s25
      // Predicated region
      $region109: #{tpu_custom_call.1} parent=5 // pred_check
        %p1723 = pneg %p1722
      $region110: #{tpu_custom_call.1} parent=5 // pred_check_branch
        %1725 = sbr.rel (%p1723) target = $region112
      $region111: #{tpu_custom_call.1} parent=5 // pred_region
        %s1726 = ssub.s32 %s25, 2
      $region112: #{tpu_custom_call.1} parent=5 // pred_fallthru
        _
    $region6: #{tpu_custom_call.1} parent=1 // loop_footer
      %s29 = sadd.s32 1, %s25
    $region7: #{tpu_custom_call.1} parent=1 // loop_footer_branch
      %24 = sbr.rel target = $region3
    $region8: #{tpu_custom_call.1} parent=1 // loop_exit
      _
    %1727 = vsyncpa [#allocation4], 1
    %s1728 = scalar_lea.sflag [#allocation4], 1
    %1729 = vsyncpa %s1728, 1

</llo_original>
